<compile_context>
chip_gen: v7x
topology: tpu7x:2x2x1
jax: 0.10.0
libtpu: 0.0.40
codegen_flags: <defaults>
</compile_context>

<pallas_src>
import jax
import jax.numpy as jnp
from jax import lax
from jax.experimental import pallas as pl
from jax.experimental.pallas import tpu as pltpu

EPS = 1e-5


def _sigmoid(x):
    # exp -> EUP, approx reciprocal -> EUP: keeps the sigmoid off the VALU path.
    return pl.reciprocal(1.0 + jnp.exp(-x), approx=True)


def _shift_seg(x, d, pos, seg_len):
    """result[..., p] = x[..., p + d] within each length-`seg_len` segment of the
    flattened last axis, zero outside the segment.  `pos` is a precomputed
    (1, N*seg_len) int32 array of per-segment positions (p mod seg_len)."""
    if d == 0:
        return x
    n_lane = x.shape[-1]
    if n_lane % 128 == 0:
        # XLU lane rotation (off the VALU / vst path); wraparound is masked below.
        rolled = pltpu.roll(x, (-d) % n_lane, axis=x.ndim - 1)
    else:
        # Fallback for lane sizes the lane-rotate may not accept.
        if d > 0:
            rolled = jnp.concatenate(
                [x[..., d:], jnp.zeros_like(x[..., :d])], axis=-1)
        else:
            rolled = jnp.concatenate(
                [jnp.zeros_like(x[..., :(-d)]), x[..., :d]], axis=-1)
    if d > 0:
        mask = pos < (seg_len - d)
    else:
        mask = pos >= (-d)
    return jnp.where(mask, rolled, 0.0)


def _upconv_ca_kernel(x_ref, wstk_ref, gamma_ref, beta_ref, fc1_ref, fc2_ref,
                      wsp_ref, out_e_ref, out_o_ref):
    N, Cin, L = x_ref.shape          # original (NOT upsampled) input, NCL layout
    Cout = gamma_ref.shape[0]
    NL = N * L

    # Per-segment lane positions (p mod L) for the flattened (N*L) lane axis,
    # built without integer mod: one (1, L) iota tiled N times.
    pos_l = lax.broadcasted_iota(jnp.int32, (1, L), 1)
    pos = jnp.concatenate([pos_l] * N, axis=-1)                      # (1, NL)

    # ---- Input relayout (N, Cin, L) -> (Cin, N*L): lane-concat of per-sample
    # slabs (O(|x|) copy, far below the conv matmul traffic).
    xc = jnp.concatenate([x_ref[n] for n in range(N)], axis=-1)      # (Cin, NL)

    # ---- Upsample(x2, nearest) + Conv1d(k=3, pad=1), polyphase, ONE 2-D matmul.
    # even output l=2t:   W0 . x[t-1] + (W1+W2) . x[t]
    # odd  output l=2t+1: (W0+W1) . x[t] + W2 . x[t+1]
    # wstk = [W0 ; W1+W2 ; W0+W1 ; W2]  -> (4*Cout, Cin)
    # TODO(synk): cast operands to bf16 (keep f32 accumulation) at MXU-scale shapes.
    y4 = jnp.dot(wstk_ref[...], xc, preferred_element_type=jnp.float32)  # (4Cout, NL)
    w0x = y4[0 * Cout:1 * Cout]      # W0      . x
    w12x = y4[1 * Cout:2 * Cout]     # (W1+W2) . x
    w01x = y4[2 * Cout:3 * Cout]     # (W0+W1) . x
    w2x = y4[3 * Cout:4 * Cout]      # W2      . x
    ye = _shift_seg(w0x, -1, pos, L) + w12x        # even phase   (Cout, NL)
    yo = w01x + _shift_seg(w2x, +1, pos, L)        # odd  phase   (Cout, NL)
    # Conv bias intentionally omitted: a per-channel constant is exactly removed
    # by the training-mode BatchNorm below (it only shifts the batch mean).

    # ---- BatchNorm1d (batch stats over (N, 2L) per channel) + ReLU, one pass.
    inv_cnt = 1.0 / float(2 * NL)
    s1 = ye.sum(axis=-1, keepdims=True) + yo.sum(axis=-1, keepdims=True)   # (Cout,1)
    s2 = ((ye * ye).sum(axis=-1, keepdims=True)
          + (yo * yo).sum(axis=-1, keepdims=True))
    mean = s1 * inv_cnt
    var = jnp.maximum(s2 * inv_cnt - mean * mean, 0.0)   # clamp: one-pass variance
    scale = lax.rsqrt(var + EPS) * gamma_ref[...]
    shift = beta_ref[...] - mean * scale
    ye = jnp.maximum(ye * scale + shift, 0.0)
    yo = jnp.maximum(yo * scale + shift, 0.0)

    # ---- CBAM channel attention: avg/max pool over L_up per (n, c), shared MLP.
    inv_2l = 1.0 / float(2 * L)
    avg_pieces, max_pieces = [], []
    for n in range(N):
        sl = slice(n * L, (n + 1) * L)
        e_n, o_n = ye[:, sl], yo[:, sl]
        avg_pieces.append(
            (e_n.sum(-1, keepdims=True) + o_n.sum(-1, keepdims=True)) * inv_2l)
        max_pieces.append(
            jnp.maximum(e_n.max(-1, keepdims=True), o_n.max(-1, keepdims=True)))
    avg_c = jnp.concatenate(avg_pieces, axis=-1)          # (Cout, N)
    max_c = jnp.concatenate(max_pieces, axis=-1)          # (Cout, N)
    sc = jnp.concatenate([avg_c, max_c], axis=-1)         # (Cout, 2N)
    # Two plain 2-D matmuls over all N (and both pools) at once — no broadcast_to.
    h = jnp.maximum(jnp.dot(fc1_ref[...], sc,
                            preferred_element_type=jnp.float32), 0.0)     # (H, 2N)
    z = jnp.dot(fc2_ref[...], h, preferred_element_type=jnp.float32)      # (Cout, 2N)
    att_c = _sigmoid(z[:, :N] + z[:, N:])                 # (Cout, N)
    att_full = jnp.concatenate(
        [jnp.broadcast_to(att_c[:, n:n + 1], (Cout, L)) for n in range(N)],
        axis=-1)                                          # (Cout, NL)
    ye = ye * att_full
    yo = yo * att_full

    # ---- CBAM spatial attention: k=7 / pad=3 conv over [avg,max] channel pools,
    # as a polyphase 7-tap VPU stencil.  avg & max stacked on the sublane axis.
    pe = jnp.concatenate([jnp.mean(ye, axis=0, keepdims=True),
                          jnp.max(ye, axis=0, keepdims=True)], axis=0)    # (2, NL)
    po = jnp.concatenate([jnp.mean(yo, axis=0, keepdims=True),
                          jnp.max(yo, axis=0, keepdims=True)], axis=0)    # (2, NL)
    w = [wsp_ref[:, k:k + 1] for k in range(7)]           # 7 x (2,1), hoisted once
    pe_m1 = _shift_seg(pe, -1, pos, L)
    pe_p1 = _shift_seg(pe, +1, pos, L)
    pe_p2 = _shift_seg(pe, +2, pos, L)
    po_m2 = _shift_seg(po, -2, pos, L)
    po_m1 = _shift_seg(po, -1, pos, L)
    po_p1 = _shift_seg(po, +1, pos, L)
    att_e = (w[0] * po_m2 + w[1] * pe_m1 + w[2] * po_m1 + w[3] * pe
             + w[4] * po + w[5] * pe_p1 + w[6] * po_p1).sum(axis=0, keepdims=True)
    att_o = (w[0] * pe_m1 + w[1] * po_m1 + w[2] * pe + w[3] * po
             + w[4] * pe_p1 + w[5] * po_p1 + w[6] * pe_p2).sum(axis=0, keepdims=True)
    oe = ye * _sigmoid(att_e)                              # (Cout, NL)
    oo = yo * _sigmoid(att_o)

    # ---- Store: un-flatten N from the lane axis (128-lane slabs at the demo L).
    # TODO(synk): interleave even/odd in-kernel (needs a verified lane-interleave /
    # strided-store path on the target Mosaic version); for now the wrapper does it.
    for n in range(N):
        sl = slice(n * L, (n + 1) * L)
        out_e_ref[n] = oe[:, sl]
        out_o_ref[n] = oo[:, sl]


def up_conv_ca_forward(x, params):
    """x: (N, C_in, L) float32 (NCL, PyTorch layout). Returns (N, C_out, 2L)."""
    N, Cin, L = x.shape
    W = params['wconv']                                   # (Cout, Cin, 3)
    Cout = W.shape[0]

    # Parameter-only glue (no activation-sized intermediates hit HBM here).
    w0, w1, w2 = W[:, :, 0], W[:, :, 1], W[:, :, 2]
    wstk = jnp.concatenate([w0, w1 + w2, w0 + w1, w2], axis=0)    # (4Cout, Cin)
    gamma = params['gamma'][:, None]                      # (Cout, 1)
    beta = params['beta'][:, None]
    fc1 = params['fc1']                                   # (hidden, Cout)
    fc2 = params['fc2']                                   # (Cout, hidden)
    wsp = params['wsp'][0]                                # (2, 7)
    # NOTE: params['bconv'] is not passed in: the Conv1d bias is exactly cancelled
    # by the training-mode BatchNorm that follows (per-channel constant shift).

    ins = [x, wstk, gamma, beta, fc1, fc2, wsp]

    def full(shape):
        nd = len(shape)
        return pl.BlockSpec(shape, lambda i, _nd=nd: (0,) * _nd)

    # Size the scoped VMEM from the actual intermediates (v5e default is 16 MiB).
    est = 4 * (2 * N * Cin * L + 20 * Cout * N * L + 8 * N * L) + (1 << 20)
    vmem_limit = int(min(100 * 2 ** 20, max(32 * 2 ** 20, 2 * est)))

    # TODO(synk): at realistic N*Cout*L, tile the length axis (grid over L tiles
    # with a +/-2 halo, "parallel" semantics for the second v7x core) and split
    # BatchNorm + global pooling into a two-sweep scheme (sweep 1 accumulates
    # sums/sumsq/pool partials in VMEM scratch, sweep 2 normalizes + attention).
    out_e, out_o = pl.pallas_call(
        _upconv_ca_kernel,
        out_shape=(jax.ShapeDtypeStruct((N, Cout, L), jnp.float32),
                   jax.ShapeDtypeStruct((N, Cout, L), jnp.float32)),
        grid=(1,),
        in_specs=[full(a.shape) for a in ins],
        out_specs=(full((N, Cout, L)), full((N, Cout, L))),
        compiler_params=pltpu.CompilerParams(
            dimension_semantics=("arbitrary",),
            vmem_limit_bytes=vmem_limit),
    )(*ins)

    # Even/odd phase interleave -> (N, Cout, 2L).  Output-layout glue only.
    return jnp.stack([out_e, out_o], axis=-1).reshape(N, Cout, 2 * L)


def ref_forward(x, p):
    """Pure-JAX reference mirroring the PyTorch forward (NCL layout)."""
    x = jnp.repeat(x, 2, axis=-1)
    y = lax.conv_general_dilated(x, p['wconv'], window_strides=(1,),
                                 padding=((1, 1),),
                                 dimension_numbers=('NCH', 'OIH', 'NCH'))
    y = y + p['bconv'][None, :, None]
    mean = jnp.mean(y, axis=(0, 2), keepdims=True)
    var = jnp.mean((y - mean) ** 2, axis=(0, 2), keepdims=True)
    y = (y - mean) * lax.rsqrt(var + EPS)
    y = y * p['gamma'][None, :, None] + p['beta'][None, :, None]
    y = jnp.maximum(y, 0.0)
    avg_c = jnp.mean(y, axis=2)
    max_c = jnp.max(y, axis=2)

    def mlp(v):
        return jnp.maximum(v @ p['fc1'].T, 0.0) @ p['fc2'].T

    att_c = jax.nn.sigmoid(mlp(avg_c) + mlp(max_c))
    y = y * att_c[:, :, None]
    avg_s = jnp.mean(y, axis=1, keepdims=True)
    max_s = jnp.max(y, axis=1, keepdims=True)
    s = jnp.concatenate([avg_s, max_s], axis=1)
    att = lax.conv_general_dilated(s, p['wsp'], window_strides=(1,),
                                   padding=((3, 3),),
                                   dimension_numbers=('NCH', 'OIH', 'NCH'))
    return y * jax.nn.sigmoid(att)


if __name__ == "__main__":
    # L chosen so the internal flattened lane axis (N*L = 256) and the per-phase
    # output slabs (last dim = 128) are 128-aligned -> unmasked vector stores.
    N, Cin, Cout, L = 2, 8, 16, 128
    hidden = max(Cout // 4, 1)       # CBAM channel-reduction ratio 4

    key = jax.random.PRNGKey(0)
    k = jax.random.split(key, 8)
    params = dict(
        wconv=0.1 * jax.random.normal(k[0], (Cout, Cin, 3), jnp.float32),
        bconv=0.1 * jax.random.normal(k[1], (Cout,), jnp.float32),
        gamma=1.0 + 0.1 * jax.random.normal(k[2], (Cout,), jnp.float32),
        beta=0.1 * jax.random.normal(k[3], (Cout,), jnp.float32),
        fc1=0.2 * jax.random.normal(k[4], (hidden, Cout), jnp.float32),
        fc2=0.2 * jax.random.normal(k[5], (Cout, hidden), jnp.float32),
        wsp=0.2 * jax.random.normal(k[6], (1, 2, 7), jnp.float32),
    )
    x = jax.random.normal(k[7], (N, Cin, L), jnp.float32)

    out = jax.block_until_ready(up_conv_ca_forward(x, params))
    ref = jax.block_until_ready(ref_forward(x, params))

    assert out.shape == (N, Cout, 2 * L), out.shape
    assert jnp.allclose(out, ref, rtol=2e-2, atol=2e-2), \
        float(jnp.max(jnp.abs(out - ref)))
    print("KERNEL_OK")
</pallas_src>

<mosaic_0001>
module attributes {stable_mosaic.version = 11 : i64} {
  func.func @_upconv_ca_kernel(%arg0: i32, %arg1: memref<2x8x128xf32, #tpu.memory_space<vmem>>, %arg2: memref<64x8xf32, #tpu.memory_space<vmem>>, %arg3: memref<16x1xf32, #tpu.memory_space<vmem>>, %arg4: memref<16x1xf32, #tpu.memory_space<vmem>>, %arg5: memref<4x16xf32, #tpu.memory_space<vmem>>, %arg6: memref<16x4xf32, #tpu.memory_space<vmem>>, %arg7: memref<2x7xf32, #tpu.memory_space<vmem>>, %arg8: memref<2x16x128xf32, #tpu.memory_space<vmem>>, %arg9: memref<2x16x128xf32, #tpu.memory_space<vmem>>) attributes {dimension_semantics = [#tpu.dimension_semantics<arbitrary>], iteration_bounds = array<i64: 1>, scalar_prefetch = 0 : i64, scratch_operands = 0 : i64, tpu.core_type = #tpu.core_type<tc>, window_params = [{pipeline_mode = #tpu.pipeline_mode<synchronous>, transform_indices = @transform_0, window_bounds = array<i64: 2, 8, 128>}, {pipeline_mode = #tpu.pipeline_mode<synchronous>, transform_indices = @transform_1, window_bounds = array<i64: 64, 8>}, {pipeline_mode = #tpu.pipeline_mode<synchronous>, transform_indices = @transform_2, window_bounds = array<i64: 16, 1>}, {pipeline_mode = #tpu.pipeline_mode<synchronous>, transform_indices = @transform_3, window_bounds = array<i64: 16, 1>}, {pipeline_mode = #tpu.pipeline_mode<synchronous>, transform_indices = @transform_4, window_bounds = array<i64: 4, 16>}, {pipeline_mode = #tpu.pipeline_mode<synchronous>, transform_indices = @transform_5, window_bounds = array<i64: 16, 4>}, {pipeline_mode = #tpu.pipeline_mode<synchronous>, transform_indices = @transform_6, window_bounds = array<i64: 2, 7>}, {pipeline_mode = #tpu.pipeline_mode<synchronous>, transform_indices = @transform_7, window_bounds = array<i64: 2, 16, 128>}, {pipeline_mode = #tpu.pipeline_mode<synchronous>, transform_indices = @transform_8, window_bounds = array<i64: 2, 16, 128>}]} {
    %0 = tpu.iota {dimensions = array<i32: 1>} : vector<1x128xi32>
    %1 = tpu.concatenate %0, %0 in 1 : vector<1x128xi32>, vector<1x128xi32> -> vector<1x256xi32>
    %c0 = arith.constant 0 : index
    %c0_0 = arith.constant 0 : index
    %c0_1 = arith.constant 0 : index
    %2 = vector.load %arg1[%c0, %c0_0, %c0_1] : memref<2x8x128xf32, #tpu.memory_space<vmem>>, vector<1x8x128xf32>
    %3 = vector.shape_cast %2 : vector<1x8x128xf32> to vector<8x128xf32>
    %c1 = arith.constant 1 : index
    %c0_2 = arith.constant 0 : index
    %c0_3 = arith.constant 0 : index
    %4 = vector.load %arg1[%c1, %c0_2, %c0_3] : memref<2x8x128xf32, #tpu.memory_space<vmem>>, vector<1x8x128xf32>
    %5 = vector.shape_cast %4 : vector<1x8x128xf32> to vector<8x128xf32>
    %6 = tpu.concatenate %3, %5 in 1 : vector<8x128xf32>, vector<8x128xf32> -> vector<8x256xf32>
    %c0_4 = arith.constant 0 : index
    %c0_5 = arith.constant 0 : index
    %7 = vector.load %arg2[%c0_4, %c0_5] : memref<64x8xf32, #tpu.memory_space<vmem>>, vector<64x8xf32>
    %cst = arith.constant dense<0.000000e+00> : vector<64x256xf32>
    %8 = tpu.matmul %7, %6, %cst {dimension_numbers = #tpu.dot_dimension_numbers<[1], [0], [0], [1], [0, 0, 1, 1], [], []>} : vector<64x8xf32>, vector<8x256xf32>, vector<64x256xf32> -> vector<64x256xf32>
    %9 = vector.extract_strided_slice %8 {offsets = [0, 0], sizes = [16, 256], strides = [1, 1]} : vector<64x256xf32> to vector<16x256xf32>
    %10 = vector.extract_strided_slice %8 {offsets = [16, 0], sizes = [16, 256], strides = [1, 1]} : vector<64x256xf32> to vector<16x256xf32>
    %11 = vector.extract_strided_slice %8 {offsets = [32, 0], sizes = [16, 256], strides = [1, 1]} : vector<64x256xf32> to vector<16x256xf32>
    %12 = vector.extract_strided_slice %8 {offsets = [48, 0], sizes = [16, 256], strides = [1, 1]} : vector<64x256xf32> to vector<16x256xf32>
    %c1_i32 = arith.constant 1 : i32
    %13 = tpu.dynamic_rotate %9 by %c1_i32 dim 1 : vector<16x256xf32>, i32 -> vector<16x256xf32>
    %c1_i32_6 = arith.constant 1 : i32
    %14 = vector.broadcast %c1_i32_6 : i32 to vector<1x256xi32>
    %15 = arith.cmpi sge, %1, %14 : vector<1x256xi32>
    %cst_7 = arith.constant 0.000000e+00 : f32
    %16 = vector.shape_cast %15 : vector<1x256xi1> to vector<1x256xi1>
    %17 = vector.broadcast %16 : vector<1x256xi1> to vector<16x256xi1>
    %18 = vector.broadcast %cst_7 : f32 to vector<16x256xf32>
    %19 = arith.select %17, %13, %18 : vector<16x256xi1>, vector<16x256xf32>
    %20 = arith.addf %19, %10 : vector<16x256xf32>
    %c255_i32 = arith.constant 255 : i32
    %21 = tpu.dynamic_rotate %12 by %c255_i32 dim 1 : vector<16x256xf32>, i32 -> vector<16x256xf32>
    %c127_i32 = arith.constant 127 : i32
    %22 = vector.broadcast %c127_i32 : i32 to vector<1x256xi32>
    %23 = arith.cmpi slt, %1, %22 : vector<1x256xi32>
    %cst_8 = arith.constant 0.000000e+00 : f32
    %24 = vector.shape_cast %23 : vector<1x256xi1> to vector<1x256xi1>
    %25 = vector.broadcast %24 : vector<1x256xi1> to vector<16x256xi1>
    %26 = vector.broadcast %cst_8 : f32 to vector<16x256xf32>
    %27 = arith.select %25, %21, %26 : vector<16x256xi1>, vector<16x256xf32>
    %28 = arith.addf %11, %27 : vector<16x256xf32>
    %cst_9 = arith.constant dense<0.000000e+00> : vector<16xf32>
    %29 = vector.multi_reduction <add>, %20, %cst_9 [1] : vector<16x256xf32> to vector<16xf32>
    %30 = vector.shape_cast %29 : vector<16xf32> to vector<16x1xf32>
    %cst_10 = arith.constant dense<0.000000e+00> : vector<16xf32>
    %31 = vector.multi_reduction <add>, %28, %cst_10 [1] : vector<16x256xf32> to vector<16xf32>
    %32 = vector.shape_cast %31 : vector<16xf32> to vector<16x1xf32>
    %33 = arith.addf %30, %32 : vector<16x1xf32>
    %34 = arith.mulf %20, %20 : vector<16x256xf32>
    %cst_11 = arith.constant dense<0.000000e+00> : vector<16xf32>
    %35 = vector.multi_reduction <add>, %34, %cst_11 [1] : vector<16x256xf32> to vector<16xf32>
    %36 = vector.shape_cast %35 : vector<16xf32> to vector<16x1xf32>
    %37 = arith.mulf %28, %28 : vector<16x256xf32>
    %cst_12 = arith.constant dense<0.000000e+00> : vector<16xf32>
    %38 = vector.multi_reduction <add>, %37, %cst_12 [1] : vector<16x256xf32> to vector<16xf32>
    %39 = vector.shape_cast %38 : vector<16xf32> to vector<16x1xf32>
    %40 = arith.addf %36, %39 : vector<16x1xf32>
    %cst_13 = arith.constant 0.001953125 : f32
    %41 = vector.broadcast %cst_13 : f32 to vector<16x1xf32>
    %42 = arith.mulf %33, %41 : vector<16x1xf32>
    %cst_14 = arith.constant 0.001953125 : f32
    %43 = vector.broadcast %cst_14 : f32 to vector<16x1xf32>
    %44 = arith.mulf %40, %43 : vector<16x1xf32>
    %45 = arith.mulf %42, %42 : vector<16x1xf32>
    %46 = arith.subf %44, %45 : vector<16x1xf32>
    %cst_15 = arith.constant 0.000000e+00 : f32
    %47 = vector.broadcast %cst_15 : f32 to vector<16x1xf32>
    %48 = arith.maximumf %46, %47 : vector<16x1xf32>
    %cst_16 = arith.constant 9.99999974E-6 : f32
    %49 = vector.broadcast %cst_16 : f32 to vector<16x1xf32>
    %50 = arith.addf %48, %49 : vector<16x1xf32>
    %51 = math.rsqrt %50 : vector<16x1xf32>
    %c0_17 = arith.constant 0 : index
    %c0_18 = arith.constant 0 : index
    %52 = vector.load %arg3[%c0_17, %c0_18] : memref<16x1xf32, #tpu.memory_space<vmem>>, vector<16x1xf32>
    %53 = arith.mulf %51, %52 : vector<16x1xf32>
    %c0_19 = arith.constant 0 : index
    %c0_20 = arith.constant 0 : index
    %54 = vector.load %arg4[%c0_19, %c0_20] : memref<16x1xf32, #tpu.memory_space<vmem>>, vector<16x1xf32>
    %55 = arith.mulf %42, %53 : vector<16x1xf32>
    %56 = arith.subf %54, %55 : vector<16x1xf32>
    %57 = vector.broadcast %53 : vector<16x1xf32> to vector<16x256xf32>
    %58 = arith.mulf %20, %57 : vector<16x256xf32>
    %59 = vector.broadcast %56 : vector<16x1xf32> to vector<16x256xf32>
    %60 = arith.addf %58, %59 : vector<16x256xf32>
    %cst_21 = arith.constant 0.000000e+00 : f32
    %61 = vector.broadcast %cst_21 : f32 to vector<16x256xf32>
    %62 = arith.maximumf %60, %61 : vector<16x256xf32>
    %63 = vector.broadcast %53 : vector<16x1xf32> to vector<16x256xf32>
    %64 = arith.mulf %28, %63 : vector<16x256xf32>
    %65 = vector.broadcast %56 : vector<16x1xf32> to vector<16x256xf32>
    %66 = arith.addf %64, %65 : vector<16x256xf32>
    %cst_22 = arith.constant 0.000000e+00 : f32
    %67 = vector.broadcast %cst_22 : f32 to vector<16x256xf32>
    %68 = arith.maximumf %66, %67 : vector<16x256xf32>
    %69 = vector.extract_strided_slice %62 {offsets = [0, 0], sizes = [16, 128], strides = [1, 1]} : vector<16x256xf32> to vector<16x128xf32>
    %70 = vector.extract_strided_slice %68 {offsets = [0, 0], sizes = [16, 128], strides = [1, 1]} : vector<16x256xf32> to vector<16x128xf32>
    %cst_23 = arith.constant dense<0.000000e+00> : vector<16xf32>
    %71 = vector.multi_reduction <add>, %69, %cst_23 [1] : vector<16x128xf32> to vector<16xf32>
    %72 = vector.shape_cast %71 : vector<16xf32> to vector<16x1xf32>
    %cst_24 = arith.constant dense<0.000000e+00> : vector<16xf32>
    %73 = vector.multi_reduction <add>, %70, %cst_24 [1] : vector<16x128xf32> to vector<16xf32>
    %74 = vector.shape_cast %73 : vector<16xf32> to vector<16x1xf32>
    %75 = arith.addf %72, %74 : vector<16x1xf32>
    %cst_25 = arith.constant 3.906250e-03 : f32
    %76 = vector.broadcast %cst_25 : f32 to vector<16x1xf32>
    %77 = arith.mulf %75, %76 : vector<16x1xf32>
    %cst_26 = arith.constant dense<0xFF800000> : vector<16xf32>
    %78 = vector.multi_reduction <maximumf>, %69, %cst_26 [1] : vector<16x128xf32> to vector<16xf32>
    %79 = vector.shape_cast %78 : vector<16xf32> to vector<16x1xf32>
    %cst_27 = arith.constant dense<0xFF800000> : vector<16xf32>
    %80 = vector.multi_reduction <maximumf>, %70, %cst_27 [1] : vector<16x128xf32> to vector<16xf32>
    %81 = vector.shape_cast %80 : vector<16xf32> to vector<16x1xf32>
    %82 = arith.maximumf %79, %81 : vector<16x1xf32>
    %83 = vector.extract_strided_slice %62 {offsets = [0, 128], sizes = [16, 128], strides = [1, 1]} : vector<16x256xf32> to vector<16x128xf32>
    %84 = vector.extract_strided_slice %68 {offsets = [0, 128], sizes = [16, 128], strides = [1, 1]} : vector<16x256xf32> to vector<16x128xf32>
    %cst_28 = arith.constant dense<0.000000e+00> : vector<16xf32>
    %85 = vector.multi_reduction <add>, %83, %cst_28 [1] : vector<16x128xf32> to vector<16xf32>
    %86 = vector.shape_cast %85 : vector<16xf32> to vector<16x1xf32>
    %cst_29 = arith.constant dense<0.000000e+00> : vector<16xf32>
    %87 = vector.multi_reduction <add>, %84, %cst_29 [1] : vector<16x128xf32> to vector<16xf32>
    %88 = vector.shape_cast %87 : vector<16xf32> to vector<16x1xf32>
    %89 = arith.addf %86, %88 : vector<16x1xf32>
    %cst_30 = arith.constant 3.906250e-03 : f32
    %90 = vector.broadcast %cst_30 : f32 to vector<16x1xf32>
    %91 = arith.mulf %89, %90 : vector<16x1xf32>
    %cst_31 = arith.constant dense<0xFF800000> : vector<16xf32>
    %92 = vector.multi_reduction <maximumf>, %83, %cst_31 [1] : vector<16x128xf32> to vector<16xf32>
    %93 = vector.shape_cast %92 : vector<16xf32> to vector<16x1xf32>
    %cst_32 = arith.constant dense<0xFF800000> : vector<16xf32>
    %94 = vector.multi_reduction <maximumf>, %84, %cst_32 [1] : vector<16x128xf32> to vector<16xf32>
    %95 = vector.shape_cast %94 : vector<16xf32> to vector<16x1xf32>
    %96 = arith.maximumf %93, %95 : vector<16x1xf32>
    %97 = tpu.concatenate %77, %91 in 1 : vector<16x1xf32>, vector<16x1xf32> -> vector<16x2xf32>
    %98 = tpu.concatenate %82, %96 in 1 : vector<16x1xf32>, vector<16x1xf32> -> vector<16x2xf32>
    %99 = tpu.concatenate %97, %98 in 1 : vector<16x2xf32>, vector<16x2xf32> -> vector<16x4xf32>
    %c0_33 = arith.constant 0 : index
    %c0_34 = arith.constant 0 : index
    %100 = vector.load %arg5[%c0_33, %c0_34] : memref<4x16xf32, #tpu.memory_space<vmem>>, vector<4x16xf32>
    %cst_35 = arith.constant dense<0.000000e+00> : vector<4x4xf32>
    %101 = tpu.matmul %100, %99, %cst_35 {dimension_numbers = #tpu.dot_dimension_numbers<[1], [0], [0], [1], [0, 0, 1, 1], [], []>} : vector<4x16xf32>, vector<16x4xf32>, vector<4x4xf32> -> vector<4x4xf32>
    %cst_36 = arith.constant 0.000000e+00 : f32
    %102 = vector.broadcast %cst_36 : f32 to vector<4x4xf32>
    %103 = arith.maximumf %101, %102 : vector<4x4xf32>
    %c0_37 = arith.constant 0 : index
    %c0_38 = arith.constant 0 : index
    %104 = vector.load %arg6[%c0_37, %c0_38] : memref<16x4xf32, #tpu.memory_space<vmem>>, vector<16x4xf32>
    %cst_39 = arith.constant dense<0.000000e+00> : vector<16x4xf32>
    %105 = tpu.matmul %104, %103, %cst_39 {dimension_numbers = #tpu.dot_dimension_numbers<[1], [0], [0], [1], [0, 0, 1, 1], [], []>} : vector<16x4xf32>, vector<4x4xf32>, vector<16x4xf32> -> vector<16x4xf32>
    %106 = vector.extract_strided_slice %105 {offsets = [0, 0], sizes = [16, 2], strides = [1, 1]} : vector<16x4xf32> to vector<16x2xf32>
    %107 = vector.extract_strided_slice %105 {offsets = [0, 2], sizes = [16, 2], strides = [1, 1]} : vector<16x4xf32> to vector<16x2xf32>
    %108 = arith.addf %106, %107 : vector<16x2xf32>
    %cst_40 = arith.constant 0.000000e+00 : f32
    %109 = vector.broadcast %cst_40 : f32 to vector<16x2xf32>
    %110 = arith.subf %109, %108 : vector<16x2xf32>
    %111 = math.exp %110 : vector<16x2xf32>
    %cst_41 = arith.constant 1.000000e+00 : f32
    %112 = vector.broadcast %cst_41 : f32 to vector<16x2xf32>
    %113 = arith.addf %112, %111 : vector<16x2xf32>
    %114 = tpu.reciprocal %113 {approx = true} : vector<16x2xf32> -> vector<16x2xf32>
    %115 = vector.extract_strided_slice %114 {offsets = [0, 0], sizes = [16, 1], strides = [1, 1]} : vector<16x2xf32> to vector<16x1xf32>
    %116 = vector.shape_cast %115 : vector<16x1xf32> to vector<16x1xf32>
    %117 = vector.broadcast %116 : vector<16x1xf32> to vector<16x128xf32>
    %118 = vector.extract_strided_slice %114 {offsets = [0, 1], sizes = [16, 1], strides = [1, 1]} : vector<16x2xf32> to vector<16x1xf32>
    %119 = vector.shape_cast %118 : vector<16x1xf32> to vector<16x1xf32>
    %120 = vector.broadcast %119 : vector<16x1xf32> to vector<16x128xf32>
    %121 = tpu.concatenate %117, %120 in 1 : vector<16x128xf32>, vector<16x128xf32> -> vector<16x256xf32>
    %122 = arith.mulf %62, %121 : vector<16x256xf32>
    %123 = arith.mulf %68, %121 : vector<16x256xf32>
    %cst_42 = arith.constant dense<0.000000e+00> : vector<256xf32>
    %124 = vector.multi_reduction <add>, %122, %cst_42 [0] : vector<16x256xf32> to vector<256xf32>
    %125 = vector.shape_cast %124 : vector<256xf32> to vector<1x256xf32>
    %cst_43 = arith.constant 1.600000e+01 : f32
    %126 = vector.broadcast %cst_43 : f32 to vector<1x256xf32>
    %127 = arith.divf %125, %126 : vector<1x256xf32>
    %cst_44 = arith.constant dense<0xFF800000> : vector<256xf32>
    %128 = vector.multi_reduction <maximumf>, %122, %cst_44 [0] : vector<16x256xf32> to vector<256xf32>
    %129 = vector.shape_cast %128 : vector<256xf32> to vector<1x256xf32>
    %130 = tpu.concatenate %127, %129 in 0 : vector<1x256xf32>, vector<1x256xf32> -> vector<2x256xf32>
    %cst_45 = arith.constant dense<0.000000e+00> : vector<256xf32>
    %131 = vector.multi_reduction <add>, %123, %cst_45 [0] : vector<16x256xf32> to vector<256xf32>
    %132 = vector.shape_cast %131 : vector<256xf32> to vector<1x256xf32>
    %cst_46 = arith.constant 1.600000e+01 : f32
    %133 = vector.broadcast %cst_46 : f32 to vector<1x256xf32>
    %134 = arith.divf %132, %133 : vector<1x256xf32>
    %cst_47 = arith.constant dense<0xFF800000> : vector<256xf32>
    %135 = vector.multi_reduction <maximumf>, %123, %cst_47 [0] : vector<16x256xf32> to vector<256xf32>
    %136 = vector.shape_cast %135 : vector<256xf32> to vector<1x256xf32>
    %137 = tpu.concatenate %134, %136 in 0 : vector<1x256xf32>, vector<1x256xf32> -> vector<2x256xf32>
    %c0_48 = arith.constant 0 : index
    %c0_49 = arith.constant 0 : index
    %138 = vector.load %arg7[%c0_48, %c0_49] : memref<2x7xf32, #tpu.memory_space<vmem>>, vector<2x1xf32>
    %c0_50 = arith.constant 0 : index
    %c1_51 = arith.constant 1 : index
    %139 = vector.load %arg7[%c0_50, %c1_51] : memref<2x7xf32, #tpu.memory_space<vmem>>, vector<2x1xf32>
    %c0_52 = arith.constant 0 : index
    %c2 = arith.constant 2 : index
    %140 = vector.load %arg7[%c0_52, %c2] : memref<2x7xf32, #tpu.memory_space<vmem>>, vector<2x1xf32>
    %c0_53 = arith.constant 0 : index
    %c3 = arith.constant 3 : index
    %141 = vector.load %arg7[%c0_53, %c3] : memref<2x7xf32, #tpu.memory_space<vmem>>, vector<2x1xf32>
    %c0_54 = arith.constant 0 : index
    %c4 = arith.constant 4 : index
    %142 = vector.load %arg7[%c0_54, %c4] : memref<2x7xf32, #tpu.memory_space<vmem>>, vector<2x1xf32>
    %c0_55 = arith.constant 0 : index
    %c5 = arith.constant 5 : index
    %143 = vector.load %arg7[%c0_55, %c5] : memref<2x7xf32, #tpu.memory_space<vmem>>, vector<2x1xf32>
    %c0_56 = arith.constant 0 : index
    %c6 = arith.constant 6 : index
    %144 = vector.load %arg7[%c0_56, %c6] : memref<2x7xf32, #tpu.memory_space<vmem>>, vector<2x1xf32>
    %c1_i32_57 = arith.constant 1 : i32
    %145 = tpu.dynamic_rotate %130 by %c1_i32_57 dim 1 : vector<2x256xf32>, i32 -> vector<2x256xf32>
    %c1_i32_58 = arith.constant 1 : i32
    %146 = vector.broadcast %c1_i32_58 : i32 to vector<1x256xi32>
    %147 = arith.cmpi sge, %1, %146 : vector<1x256xi32>
    %cst_59 = arith.constant 0.000000e+00 : f32
    %148 = vector.shape_cast %147 : vector<1x256xi1> to vector<1x256xi1>
    %149 = vector.broadcast %148 : vector<1x256xi1> to vector<2x256xi1>
    %150 = vector.broadcast %cst_59 : f32 to vector<2x256xf32>
    %151 = arith.select %149, %145, %150 : vector<2x256xi1>, vector<2x256xf32>
    %c255_i32_60 = arith.constant 255 : i32
    %152 = tpu.dynamic_rotate %130 by %c255_i32_60 dim 1 : vector<2x256xf32>, i32 -> vector<2x256xf32>
    %c127_i32_61 = arith.constant 127 : i32
    %153 = vector.broadcast %c127_i32_61 : i32 to vector<1x256xi32>
    %154 = arith.cmpi slt, %1, %153 : vector<1x256xi32>
    %cst_62 = arith.constant 0.000000e+00 : f32
    %155 = vector.shape_cast %154 : vector<1x256xi1> to vector<1x256xi1>
    %156 = vector.broadcast %155 : vector<1x256xi1> to vector<2x256xi1>
    %157 = vector.broadcast %cst_62 : f32 to vector<2x256xf32>
    %158 = arith.select %156, %152, %157 : vector<2x256xi1>, vector<2x256xf32>
    %c254_i32 = arith.constant 254 : i32
    %159 = tpu.dynamic_rotate %130 by %c254_i32 dim 1 : vector<2x256xf32>, i32 -> vector<2x256xf32>
    %c126_i32 = arith.constant 126 : i32
    %160 = vector.broadcast %c126_i32 : i32 to vector<1x256xi32>
    %161 = arith.cmpi slt, %1, %160 : vector<1x256xi32>
    %cst_63 = arith.constant 0.000000e+00 : f32
    %162 = vector.shape_cast %161 : vector<1x256xi1> to vector<1x256xi1>
    %163 = vector.broadcast %162 : vector<1x256xi1> to vector<2x256xi1>
    %164 = vector.broadcast %cst_63 : f32 to vector<2x256xf32>
    %165 = arith.select %163, %159, %164 : vector<2x256xi1>, vector<2x256xf32>
    %c2_i32 = arith.constant 2 : i32
    %166 = tpu.dynamic_rotate %137 by %c2_i32 dim 1 : vector<2x256xf32>, i32 -> vector<2x256xf32>
    %c2_i32_64 = arith.constant 2 : i32
    %167 = vector.broadcast %c2_i32_64 : i32 to vector<1x256xi32>
    %168 = arith.cmpi sge, %1, %167 : vector<1x256xi32>
    %cst_65 = arith.constant 0.000000e+00 : f32
    %169 = vector.shape_cast %168 : vector<1x256xi1> to vector<1x256xi1>
    %170 = vector.broadcast %169 : vector<1x256xi1> to vector<2x256xi1>
    %171 = vector.broadcast %cst_65 : f32 to vector<2x256xf32>
    %172 = arith.select %170, %166, %171 : vector<2x256xi1>, vector<2x256xf32>
    %c1_i32_66 = arith.constant 1 : i32
    %173 = tpu.dynamic_rotate %137 by %c1_i32_66 dim 1 : vector<2x256xf32>, i32 -> vector<2x256xf32>
    %c1_i32_67 = arith.constant 1 : i32
    %174 = vector.broadcast %c1_i32_67 : i32 to vector<1x256xi32>
    %175 = arith.cmpi sge, %1, %174 : vector<1x256xi32>
    %cst_68 = arith.constant 0.000000e+00 : f32
    %176 = vector.shape_cast %175 : vector<1x256xi1> to vector<1x256xi1>
    %177 = vector.broadcast %176 : vector<1x256xi1> to vector<2x256xi1>
    %178 = vector.broadcast %cst_68 : f32 to vector<2x256xf32>
    %179 = arith.select %177, %173, %178 : vector<2x256xi1>, vector<2x256xf32>
    %c255_i32_69 = arith.constant 255 : i32
    %180 = tpu.dynamic_rotate %137 by %c255_i32_69 dim 1 : vector<2x256xf32>, i32 -> vector<2x256xf32>
    %c127_i32_70 = arith.constant 127 : i32
    %181 = vector.broadcast %c127_i32_70 : i32 to vector<1x256xi32>
    %182 = arith.cmpi slt, %1, %181 : vector<1x256xi32>
    %cst_71 = arith.constant 0.000000e+00 : f32
    %183 = vector.shape_cast %182 : vector<1x256xi1> to vector<1x256xi1>
    %184 = vector.broadcast %183 : vector<1x256xi1> to vector<2x256xi1>
    %185 = vector.broadcast %cst_71 : f32 to vector<2x256xf32>
    %186 = arith.select %184, %180, %185 : vector<2x256xi1>, vector<2x256xf32>
    %187 = vector.broadcast %138 : vector<2x1xf32> to vector<2x256xf32>
    %188 = arith.mulf %187, %172 : vector<2x256xf32>
    %189 = vector.broadcast %139 : vector<2x1xf32> to vector<2x256xf32>
    %190 = arith.mulf %189, %151 : vector<2x256xf32>
    %191 = arith.addf %188, %190 : vector<2x256xf32>
    %192 = vector.broadcast %140 : vector<2x1xf32> to vector<2x256xf32>
    %193 = arith.mulf %192, %179 : vector<2x256xf32>
    %194 = arith.addf %191, %193 : vector<2x256xf32>
    %195 = vector.broadcast %141 : vector<2x1xf32> to vector<2x256xf32>
    %196 = arith.mulf %195, %130 : vector<2x256xf32>
    %197 = arith.addf %194, %196 : vector<2x256xf32>
    %198 = vector.broadcast %142 : vector<2x1xf32> to vector<2x256xf32>
    %199 = arith.mulf %198, %137 : vector<2x256xf32>
    %200 = arith.addf %197, %199 : vector<2x256xf32>
    %201 = vector.broadcast %143 : vector<2x1xf32> to vector<2x256xf32>
    %202 = arith.mulf %201, %158 : vector<2x256xf32>
    %203 = arith.addf %200, %202 : vector<2x256xf32>
    %204 = vector.broadcast %144 : vector<2x1xf32> to vector<2x256xf32>
    %205 = arith.mulf %204, %186 : vector<2x256xf32>
    %206 = arith.addf %203, %205 : vector<2x256xf32>
    %cst_72 = arith.constant dense<0.000000e+00> : vector<256xf32>
    %207 = vector.multi_reduction <add>, %206, %cst_72 [0] : vector<2x256xf32> to vector<256xf32>
    %208 = vector.shape_cast %207 : vector<256xf32> to vector<1x256xf32>
    %209 = vector.broadcast %138 : vector<2x1xf32> to vector<2x256xf32>
    %210 = arith.mulf %209, %151 : vector<2x256xf32>
    %211 = vector.broadcast %139 : vector<2x1xf32> to vector<2x256xf32>
    %212 = arith.mulf %211, %179 : vector<2x256xf32>
    %213 = arith.addf %210, %212 : vector<2x256xf32>
    %214 = vector.broadcast %140 : vector<2x1xf32> to vector<2x256xf32>
    %215 = arith.mulf %214, %130 : vector<2x256xf32>
    %216 = arith.addf %213, %215 : vector<2x256xf32>
    %217 = vector.broadcast %141 : vector<2x1xf32> to vector<2x256xf32>
    %218 = arith.mulf %217, %137 : vector<2x256xf32>
    %219 = arith.addf %216, %218 : vector<2x256xf32>
    %220 = vector.broadcast %142 : vector<2x1xf32> to vector<2x256xf32>
    %221 = arith.mulf %220, %158 : vector<2x256xf32>
    %222 = arith.addf %219, %221 : vector<2x256xf32>
    %223 = vector.broadcast %143 : vector<2x1xf32> to vector<2x256xf32>
    %224 = arith.mulf %223, %186 : vector<2x256xf32>
    %225 = arith.addf %222, %224 : vector<2x256xf32>
    %226 = vector.broadcast %144 : vector<2x1xf32> to vector<2x256xf32>
    %227 = arith.mulf %226, %165 : vector<2x256xf32>
    %228 = arith.addf %225, %227 : vector<2x256xf32>
    %cst_73 = arith.constant dense<0.000000e+00> : vector<256xf32>
    %229 = vector.multi_reduction <add>, %228, %cst_73 [0] : vector<2x256xf32> to vector<256xf32>
    %230 = vector.shape_cast %229 : vector<256xf32> to vector<1x256xf32>
    %cst_74 = arith.constant 0.000000e+00 : f32
    %231 = vector.broadcast %cst_74 : f32 to vector<1x256xf32>
    %232 = arith.subf %231, %208 : vector<1x256xf32>
    %233 = math.exp %232 : vector<1x256xf32>
    %cst_75 = arith.constant 1.000000e+00 : f32
    %234 = vector.broadcast %cst_75 : f32 to vector<1x256xf32>
    %235 = arith.addf %234, %233 : vector<1x256xf32>
    %236 = tpu.reciprocal %235 {approx = true} : vector<1x256xf32> -> vector<1x256xf32>
    %237 = vector.broadcast %236 : vector<1x256xf32> to vector<16x256xf32>
    %238 = arith.mulf %122, %237 : vector<16x256xf32>
    %cst_76 = arith.constant 0.000000e+00 : f32
    %239 = vector.broadcast %cst_76 : f32 to vector<1x256xf32>
    %240 = arith.subf %239, %230 : vector<1x256xf32>
    %241 = math.exp %240 : vector<1x256xf32>
    %cst_77 = arith.constant 1.000000e+00 : f32
    %242 = vector.broadcast %cst_77 : f32 to vector<1x256xf32>
    %243 = arith.addf %242, %241 : vector<1x256xf32>
    %244 = tpu.reciprocal %243 {approx = true} : vector<1x256xf32> -> vector<1x256xf32>
    %245 = vector.broadcast %244 : vector<1x256xf32> to vector<16x256xf32>
    %246 = arith.mulf %123, %245 : vector<16x256xf32>
    %247 = vector.extract_strided_slice %238 {offsets = [0, 0], sizes = [16, 128], strides = [1, 1]} : vector<16x256xf32> to vector<16x128xf32>
    %c0_78 = arith.constant 0 : index
    %c0_79 = arith.constant 0 : index
    %c0_80 = arith.constant 0 : index
    %248 = vector.load %arg8[%c0_78, %c0_79, %c0_80] : memref<2x16x128xf32, #tpu.memory_space<vmem>>, vector<1x16x128xf32>
    %249 = vector.shape_cast %248 : vector<1x16x128xf32> to vector<16x128xf32>
    %250 = vector.shape_cast %247 : vector<16x128xf32> to vector<1x16x128xf32>
    tpu.vector_store %arg8[%c0_78, %c0_79, %c0_80], %250 {strides = array<i32>} : memref<2x16x128xf32, #tpu.memory_space<vmem>>, vector<1x16x128xf32>,
    %251 = vector.extract_strided_slice %246 {offsets = [0, 0], sizes = [16, 128], strides = [1, 1]} : vector<16x256xf32> to vector<16x128xf32>
    %c0_81 = arith.constant 0 : index
    %c0_82 = arith.constant 0 : index
    %c0_83 = arith.constant 0 : index
    %252 = vector.load %arg9[%c0_81, %c0_82, %c0_83] : memref<2x16x128xf32, #tpu.memory_space<vmem>>, vector<1x16x128xf32>
    %253 = vector.shape_cast %252 : vector<1x16x128xf32> to vector<16x128xf32>
    %254 = vector.shape_cast %251 : vector<16x128xf32> to vector<1x16x128xf32>
    tpu.vector_store %arg9[%c0_81, %c0_82, %c0_83], %254 {strides = array<i32>} : memref<2x16x128xf32, #tpu.memory_space<vmem>>, vector<1x16x128xf32>,
    %255 = vector.extract_strided_slice %238 {offsets = [0, 128], sizes = [16, 128], strides = [1, 1]} : vector<16x256xf32> to vector<16x128xf32>
    %c1_84 = arith.constant 1 : index
    %c0_85 = arith.constant 0 : index
    %c0_86 = arith.constant 0 : index
    %256 = vector.load %arg8[%c1_84, %c0_85, %c0_86] : memref<2x16x128xf32, #tpu.memory_space<vmem>>, vector<1x16x128xf32>
    %257 = vector.shape_cast %256 : vector<1x16x128xf32> to vector<16x128xf32>
    %258 = vector.shape_cast %255 : vector<16x128xf32> to vector<1x16x128xf32>
    tpu.vector_store %arg8[%c1_84, %c0_85, %c0_86], %258 {strides = array<i32>} : memref<2x16x128xf32, #tpu.memory_space<vmem>>, vector<1x16x128xf32>,
    %259 = vector.extract_strided_slice %246 {offsets = [0, 128], sizes = [16, 128], strides = [1, 1]} : vector<16x256xf32> to vector<16x128xf32>
    %c1_87 = arith.constant 1 : index
    %c0_88 = arith.constant 0 : index
    %c0_89 = arith.constant 0 : index
    %260 = vector.load %arg9[%c1_87, %c0_88, %c0_89] : memref<2x16x128xf32, #tpu.memory_space<vmem>>, vector<1x16x128xf32>
    %261 = vector.shape_cast %260 : vector<1x16x128xf32> to vector<16x128xf32>
    %262 = vector.shape_cast %259 : vector<16x128xf32> to vector<1x16x128xf32>
    tpu.vector_store %arg9[%c1_87, %c0_88, %c0_89], %262 {strides = array<i32>} : memref<2x16x128xf32, #tpu.memory_space<vmem>>, vector<1x16x128xf32>,
    return
  }
  func.func @transform_0(%arg0: i32) -> (i32, i32, i32) {
    %c0_i32 = arith.constant 0 : i32
    %c0_i32_0 = arith.constant 0 : i32
    %c0_i32_1 = arith.constant 0 : i32
    %c0_i32_2 = arith.constant 0 : i32
    return %c0_i32, %c0_i32_0, %c0_i32_1 : i32, i32, i32
  }
  func.func @transform_1(%arg0: i32) -> (i32, i32) {
    %c0_i32 = arith.constant 0 : i32
    %c0_i32_0 = arith.constant 0 : i32
    %c0_i32_1 = arith.constant 0 : i32
    return %c0_i32, %c0_i32_0 : i32, i32
  }
  func.func @transform_2(%arg0: i32) -> (i32, i32) {
    %c0_i32 = arith.constant 0 : i32
    %c0_i32_0 = arith.constant 0 : i32
    %c0_i32_1 = arith.constant 0 : i32
    return %c0_i32, %c0_i32_0 : i32, i32
  }
  func.func @transform_3(%arg0: i32) -> (i32, i32) {
    %c0_i32 = arith.constant 0 : i32
    %c0_i32_0 = arith.constant 0 : i32
    %c0_i32_1 = arith.constant 0 : i32
    return %c0_i32, %c0_i32_0 : i32, i32
  }
  func.func @transform_4(%arg0: i32) -> (i32, i32) {
    %c0_i32 = arith.constant 0 : i32
    %c0_i32_0 = arith.constant 0 : i32
    %c0_i32_1 = arith.constant 0 : i32
    return %c0_i32, %c0_i32_0 : i32, i32
  }
  func.func @transform_5(%arg0: i32) -> (i32, i32) {
    %c0_i32 = arith.constant 0 : i32
    %c0_i32_0 = arith.constant 0 : i32
    %c0_i32_1 = arith.constant 0 : i32
    return %c0_i32, %c0_i32_0 : i32, i32
  }
  func.func @transform_6(%arg0: i32) -> (i32, i32) {
    %c0_i32 = arith.constant 0 : i32
    %c0_i32_0 = arith.constant 0 : i32
    %c0_i32_1 = arith.constant 0 : i32
    return %c0_i32, %c0_i32_0 : i32, i32
  }
  func.func @transform_7(%arg0: i32) -> (i32, i32, i32) {
    %c0_i32 = arith.constant 0 : i32
    %c0_i32_0 = arith.constant 0 : i32
    %c0_i32_1 = arith.constant 0 : i32
    %c0_i32_2 = arith.constant 0 : i32
    return %c0_i32, %c0_i32_0, %c0_i32_1 : i32, i32, i32
  }
  func.func @transform_8(%arg0: i32) -> (i32, i32, i32) {
    %c0_i32 = arith.constant 0 : i32
    %c0_i32_0 = arith.constant 0 : i32
    %c0_i32_1 = arith.constant 0 : i32
    %c0_i32_2 = arith.constant 0 : i32
    return %c0_i32, %c0_i32_0, %c0_i32_1 : i32, i32, i32
  }
}

</mosaic_0001>

<llo_original>
// kernel: tpu_custom_call.1
$region0: #{tpu_custom_call.1}
  #allocation0 [shape = 'u32[]', space=smem, size = 0x4, offset = 0x4, fixed_abs, tag = 'smem constant byte address 0x4 - core index']
  #allocation1 [shape = 'u32[144,128]{1,0:T(1,128)}', space=vmem, size = 0x12000, scoped, tag = 'internal scratch']
  %s0 = inlined_call_operand.vmem [shape: f32[2,8,128], index: 0, kind: input, shape index: {}]
  %s1 = inlined_call_operand.vmem [shape: f32[64,8], index: 1, kind: input, shape index: {}]
  %s2 = inlined_call_operand.vmem [shape: f32[16,1], index: 2, kind: input, shape index: {}]
  %s3 = inlined_call_operand.vmem [shape: f32[16,1], index: 3, kind: input, shape index: {}]
  %s4 = inlined_call_operand.vmem [shape: f32[4,16], index: 4, kind: input, shape index: {}]
  %s5 = inlined_call_operand.vmem [shape: f32[16,4], index: 5, kind: input, shape index: {}]
  %s6 = inlined_call_operand.vmem [shape: f32[2,7], index: 6, kind: input, shape index: {}]
  %s7 = inlined_call_operand.hbm [shape: f32[2,16,128], index: 7, kind: output, shape index: {0}]
  %s8 = inlined_call_operand.hbm [shape: f32[2,16,128], index: 8, kind: output, shape index: {1}]
  %9 = xla_tuple %s7, %s8
  %s10 = sld [smem:[#allocation0]]
  $region46: #{tpu_custom_call.1} parent=0
    _
  %s12 = ssub.s32 1, %s10
  %s13 = scalar_select 0, %s12, %s10
  $region1: #{tpu_custom_call.1} parent=0
    #allocation2 [shape = 'u8[16384]{0}', space=vmem, size = 0x4000, scoped, tag = 'output window, operand 0, single buffered']
    #allocation3 [shape = 's32[1]{0}', space=sflag, size = 0x4, scoped, tag = 'scoped memory for tpu_custom_call.1']
    #allocation4 [shape = 'u8[16384]{0}', space=vmem, size = 0x4000, scoped, tag = 'output window, operand 1, single buffered']
    #allocation5 [shape = 's32[1]{0}', space=sflag, size = 0x4, scoped, tag = 'scoped memory for tpu_custom_call.1']
    %14 = vsyncpa [#allocation3], 0
    %15 = vsyncpa [#allocation5], 0
    // Predicated region
    $region2: #{tpu_custom_call.1} parent=1 // pred_check
      _
    $region3: #{tpu_custom_call.1} parent=1 // pred_check_branch
      %17 = sbr.rel (0) target = $region5
    $region4: #{tpu_custom_call.1} parent=1 // pred_region
      _
    $region5: #{tpu_custom_call.1} parent=1 // pred_fallthru
      _
    // Predicated region
    $region6: #{tpu_custom_call.1} parent=1 // pred_check
      _
    $region7: #{tpu_custom_call.1} parent=1 // pred_check_branch
      %19 = sbr.rel (0) target = $region9
    $region8: #{tpu_custom_call.1} parent=1 // pred_region
      _
    $region9: #{tpu_custom_call.1} parent=1 // pred_fallthru
      _
    // Predicated region
    $region10: #{tpu_custom_call.1} parent=1 // pred_check
      _
    $region11: #{tpu_custom_call.1} parent=1 // pred_check_branch
      %21 = sbr.rel (0) target = $region13
    $region12: #{tpu_custom_call.1} parent=1 // pred_region
      _
    $region13: #{tpu_custom_call.1} parent=1 // pred_fallthru
      _
    // Predicated region
    $region14: #{tpu_custom_call.1} parent=1 // pred_check
      _
    $region15: #{tpu_custom_call.1} parent=1 // pred_check_branch
      %23 = sbr.rel (0) target = $region17
    $region16: #{tpu_custom_call.1} parent=1 // pred_region
      _
    $region17: #{tpu_custom_call.1} parent=1 // pred_fallthru
      _
    // Predicated region
    $region18: #{tpu_custom_call.1} parent=1 // pred_check
      _
    $region19: #{tpu_custom_call.1} parent=1 // pred_check_branch
      %25 = sbr.rel (0) target = $region21
    $region20: #{tpu_custom_call.1} parent=1 // pred_region
      _
    $region21: #{tpu_custom_call.1} parent=1 // pred_fallthru
      _
    // Predicated region
    $region22: #{tpu_custom_call.1} parent=1 // pred_check
      _
    $region23: #{tpu_custom_call.1} parent=1 // pred_check_branch
      %27 = sbr.rel (0) target = $region25
    $region24: #{tpu_custom_call.1} parent=1 // pred_region
      _
    $region25: #{tpu_custom_call.1} parent=1 // pred_fallthru
      _
    // Predicated region
    $region26: #{tpu_custom_call.1} parent=1 // pred_check
      _
    $region27: #{tpu_custom_call.1} parent=1 // pred_check_branch
      %29 = sbr.rel (0) target = $region29
    $region28: #{tpu_custom_call.1} parent=1 // pred_region
      _
    $region29: #{tpu_custom_call.1} parent=1 // pred_fallthru
      _
    %v30 = vlaneseq
    %v31 = vand.u32 %v30, 127
    %v32 = vld [vmem:[%s0] sm:$0xff]
    %s33 = scalar_lea.vmem %s0, 8
    %v34 = vld [vmem:[%s33] sm:$0xff]
    %v35 = vld [vmem:[%s1] sm:$0xff]
    %v36 = vld [vmem:[%s1 + $0x8] sm:$0xff]
    %v37 = vld [vmem:[%s1 + $0x10] sm:$0xff]
    %v38 = vld [vmem:[%s1 + $0x18] sm:$0xff]
    %v39 = vld [vmem:[%s1 + $0x20] sm:$0xff]
    %v40 = vld [vmem:[%s1 + $0x28] sm:$0xff]
    %v41 = vld [vmem:[%s1 + $0x30] sm:$0xff]
    %v42 = vld [vmem:[%s1 + $0x38] sm:$0xff]
    %vm43 = vcmask 64512
    %v45 = vsel %vm43, %v35, 0
    %v48 = vsel %vm43, %v36, 0
    %v51 = vsel %vm43, %v37, 0
    %v54 = vsel %vm43, %v38, 0
    %v57 = vsel %vm43, %v39, 0
    %v60 = vsel %vm43, %v40, 0
    %v63 = vsel %vm43, %v41, 0
    %v66 = vsel %vm43, %v42, 0
    %68 = vmatprep.subr.mxu0 %v34
    %69 = vmatpush1.msra.mxu0 %v32
    %70 = vmatprep.subr.mxu0 0.0
    %71 = vmatpush1.msra.mxu0 0.0
    %72 = vmatprep.subr.mxu0 0.0
    %73 = vmatpush1.msra.mxu0 0.0
    %74 = vmatprep.subr.mxu0 0.0
    %75 = vmatpush1.msra.mxu0 0.0
    %76 = vmatprep.subr.mxu0 0.0
    %77 = vmatpush1.msra.mxu0 0.0
    %78 = vmatprep.subr.mxu0 0.0
    %79 = vmatpush1.msra.mxu0 0.0
    %80 = vmatprep.subr.mxu0 0.0
    %81 = vmatpush1.msra.mxu0 0.0
    %82 = vmatprep.subr.mxu0 0.0
    %83 = vmatpush1.msra.mxu0 0.0
    %84 = vmatprep.subr.mxu0 0.0
    %85 = vmatpush1.msra.mxu0 0.0
    %86 = vmatprep.subr.mxu0 0.0
    %87 = vmatpush1.msra.mxu0 0.0
    %88 = vmatprep.subr.mxu0 0.0
    %89 = vmatpush1.msra.mxu0 0.0
    %90 = vmatprep.subr.mxu0 0.0
    %91 = vmatpush1.msra.mxu0 0.0
    %92 = vmatprep.subr.mxu0 0.0
    %93 = vmatpush1.msra.mxu0 0.0
    %94 = vmatprep.subr.mxu0 0.0
    %95 = vmatpush1.msra.mxu0 0.0
    %96 = vmatprep.subr.mxu0 0.0
    %97 = vmatpush1.msra.mxu0 0.0
    %98 = vmatprep.subr.mxu0 0.0
    %99 = vmatpush1.msra.mxu0 0.0
    %100 = vmatprep.subr.mxu0 0.0
    %101 = vmatpush1.msra.mxu0 0.0
    %102 = vmatprep.subr.mxu0 0.0
    %103 = vmatpush1.msra.mxu0 0.0
    %104 = vmatprep.subr.mxu0 0.0
    %105 = vmatpush1.msra.mxu0 0.0
    %106 = vmatprep.subr.mxu0 0.0
    %107 = vmatpush1.msra.mxu0 0.0
    %108 = vmatprep.subr.mxu0 0.0
    %109 = vmatpush1.msra.mxu0 0.0
    %110 = vmatprep.subr.mxu0 0.0
    %111 = vmatpush1.msra.mxu0 0.0
    %112 = vmatprep.subr.mxu0 0.0
    %113 = vmatpush1.msra.mxu0 0.0
    %114 = vmatprep.subr.mxu0 0.0
    %115 = vmatpush1.msra.mxu0 0.0
    %116 = vmatprep.subr.mxu0 0.0
    %117 = vmatpush1.msra.mxu0 0.0
    %118 = vmatprep.subr.mxu0 0.0
    %119 = vmatpush1.msra.mxu0 0.0
    %120 = vmatprep.subr.mxu0 0.0
    %121 = vmatpush1.msra.mxu0 0.0
    %122 = vmatprep.subr.mxu0 0.0
    %123 = vmatpush1.msra.mxu0 0.0
    %124 = vmatprep.subr.mxu0 0.0
    %125 = vmatpush1.msra.mxu0 0.0
    %126 = vmatprep.subr.mxu0 0.0
    %127 = vmatpush1.msra.mxu0 0.0
    %128 = vmatprep.subr.mxu0 0.0
    %129 = vmatpush1.msra.mxu0 0.0
    %130 = vmatprep.subr.mxu0 0.0
    %131 = vmatpush1.msra.mxu0 0.0
    %132 = vmatprep.mubr.f32.mxu0 0.0
    %133 = vmatmul.mubr.f32.gmra.mrb[0].mxu0 %v45
    %v134 = vpop.f32.mrb[0].mxu0
    %v135 = vadd.f32 0.0, %v134
    %v136 = vpop.f32.mrb[0].mxu0
    %v137 = vadd.f32 0.0, %v136
    %138 = vmatprep.mubr.f32.mxu0 0.0
    %139 = vmatmul.mubr.f32.gmra.mrb[0].mxu0 %v48
    %v140 = vpop.f32.mrb[0].mxu0
    %v141 = vadd.f32 0.0, %v140
    %v142 = vpop.f32.mrb[0].mxu0
    %v143 = vadd.f32 0.0, %v142
    %144 = vmatprep.mubr.f32.mxu0 0.0
    %145 = vmatmul.mubr.f32.gmra.mrb[0].mxu0 %v51
    %v146 = vpop.f32.mrb[0].mxu0
    %v147 = vadd.f32 0.0, %v146
    %v148 = vpop.f32.mrb[0].mxu0
    %v149 = vadd.f32 0.0, %v148
    %150 = vmatprep.mubr.f32.mxu0 0.0
    %151 = vmatmul.mubr.f32.gmra.mrb[0].mxu0 %v54
    %v152 = vpop.f32.mrb[0].mxu0
    %v153 = vadd.f32 0.0, %v152
    %v154 = vpop.f32.mrb[0].mxu0
    %v155 = vadd.f32 0.0, %v154
    %156 = vmatprep.mubr.f32.mxu0 0.0
    %157 = vmatmul.mubr.f32.gmra.mrb[0].mxu0 %v57
    %v158 = vpop.f32.mrb[0].mxu0
    %v159 = vadd.f32 0.0, %v158
    %v160 = vpop.f32.mrb[0].mxu0
    %v161 = vadd.f32 0.0, %v160
    %162 = vmatprep.mubr.f32.mxu0 0.0
    %163 = vmatmul.mubr.f32.gmra.mrb[0].mxu0 %v60
    %v164 = vpop.f32.mrb[0].mxu0
    %v165 = vadd.f32 0.0, %v164
    %v166 = vpop.f32.mrb[0].mxu0
    %v167 = vadd.f32 0.0, %v166
    %168 = vmatprep.mubr.f32.mxu0 0.0
    %169 = vmatmul.mubr.f32.gmra.mrb[0].mxu0 %v63
    %v170 = vpop.f32.mrb[0].mxu0
    %v171 = vadd.f32 0.0, %v170
    %v172 = vpop.f32.mrb[0].mxu0
    %v173 = vadd.f32 0.0, %v172
    %174 = vmatprep.mubr.f32.mxu0 0.0
    %175 = vmatmul.mubr.f32.gmra.mrb[0].mxu0 %v66
    %v176 = vpop.f32.mrb[0].mxu0
    %v177 = vadd.f32 0.0, %v176
    %v178 = vpop.f32.mrb[0].mxu0
    %v179 = vadd.f32 0.0, %v178
    %180 = vdwg.mxu0
    %181 = vrot.lane.b32.xlu0 %v135, 1
    %v182 = vpop.permute.xlu0 %181
    %183 = vrot.lane.b32.xlu0 %v141, 1
    %v184 = vpop.permute.xlu0 %183
    %185 = vrot.lane.b32.xlu0 %v137, 1
    %v186 = vpop.permute.xlu0 %185
    %187 = vrot.lane.b32.xlu0 %v143, 1
    %v188 = vpop.permute.xlu0 %187
    %vm189 = vcmp.lt.s32.totalorder %v31, 1
    %v190 = vsel %vm189, %v182, %v186
    %v191 = vsel %vm189, %v184, %v188
    %v192 = vsel %vm189, %v186, %v182
    %v193 = vsel %vm189, %v188, %v184
    %vm194 = vcmp.ge.s32.totalorder %v31, 1
    %v195 = vsel %vm194, 1, 0
    %v196 = vlaneseq
    %v197 = vshrl.u32 %v196, 7
    %v198 = vsub.s32 0, %v197
    %v199 = vrot.slane %v195, %v198
    %vm200 = vcmp.eq.s32.totalorder %v199, 1
    %v201 = vsel %vm200, %v192, 0.0
    %v202 = vsel %vm200, %v190, 0.0
    %v203 = vsel %vm200, %v193, 0.0
    %v204 = vsel %vm200, %v191, 0.0
    %v205 = vadd.f32 %v201, %v147
    %v206 = vadd.f32 %v202, %v149
    %v207 = vadd.f32 %v203, %v153
    %v208 = vadd.f32 %v204, %v155
    %209 = vrot.lane.b32.xlu0 %v171, 127
    %v210 = vpop.permute.xlu0 %209
    %211 = vrot.lane.b32.xlu0 %v177, 127
    %v212 = vpop.permute.xlu0 %211
    %213 = vrot.lane.b32.xlu0 %v173, 127
    %v214 = vpop.permute.xlu0 %213
    %215 = vrot.lane.b32.xlu0 %v179, 127
    %v216 = vpop.permute.xlu0 %215
    %vm217 = vcmp.lt.s32.totalorder %v31, 127
    %v218 = vsel %vm217, %v210, %v214
    %v219 = vsel %vm217, %v212, %v216
    %v220 = vsel %vm217, %v214, %v210
    %v221 = vsel %vm217, %v216, %v212
    %v222 = vsel %vm217, 1, 0
    %v223 = vlaneseq
    %v224 = vshrl.u32 %v223, 7
    %v225 = vsub.s32 0, %v224
    %v226 = vrot.slane %v222, %v225
    %vm227 = vcmp.eq.s32.totalorder %v226, 1
    %v228 = vsel %vm227, %v218, 0.0
    %v229 = vsel %vm227, %v220, 0.0
    %v230 = vsel %vm227, %v219, 0.0
    %v231 = vsel %vm227, %v221, 0.0
    %v232 = vadd.f32 %v159, %v228
    %v233 = vadd.f32 %v161, %v229
    %v234 = vadd.f32 %v165, %v230
    %v235 = vadd.f32 %v167, %v231
    %v236 = vadd.f32 %v205, %v206
    %237 = vadd.xlane.f32.xlu0 %v236
    %v238 = vpop.xlane.xlu0 %237
    %v239 = vadd.f32 %v207, %v208
    %240 = vadd.xlane.f32.xlu0 %v239
    %v241 = vpop.xlane.xlu0 %240
    %v242 = vadd.f32 %v232, %v233
    %243 = vadd.xlane.f32.xlu0 %v242
    %v244 = vpop.xlane.xlu0 %243
    %v245 = vadd.f32 %v234, %v235
    %246 = vadd.xlane.f32.xlu0 %v245
    %v247 = vpop.xlane.xlu0 %246
    %v248 = vadd.f32 %v238, %v244
    %v249 = vadd.f32 %v241, %v247
    %v250 = vmul.f32 %v205, %v205
    %v251 = vmul.f32 %v206, %v206
    %v252 = vmul.f32 %v207, %v207
    %v253 = vmul.f32 %v208, %v208
    %v254 = vadd.f32 %v250, %v251
    %255 = vadd.xlane.f32.xlu0 %v254
    %v256 = vpop.xlane.xlu0 %255
    %v257 = vadd.f32 %v252, %v253
    %258 = vadd.xlane.f32.xlu0 %v257
    %v259 = vpop.xlane.xlu0 %258
    %v260 = vmul.f32 %v232, %v232
    %v261 = vmul.f32 %v233, %v233
    %v262 = vmul.f32 %v234, %v234
    %v263 = vmul.f32 %v235, %v235
    %v264 = vadd.f32 %v260, %v261
    %265 = vadd.xlane.f32.xlu0 %v264
    %v266 = vpop.xlane.xlu0 %265
    %v267 = vadd.f32 %v262, %v263
    %268 = vadd.xlane.f32.xlu0 %v267
    %v269 = vpop.xlane.xlu0 %268
    %v270 = vadd.f32 %v256, %v266
    %v271 = vadd.f32 %v259, %v269
    %v272 = vmul.f32 %v248, 0.001953125
    %v273 = vmul.f32 %v249, 0.001953125
    %v274 = vmul.f32 %v270, 0.001953125
    %v275 = vmul.f32 %v271, 0.001953125
    %v276 = vmul.f32 %v272, %v272
    %v277 = vmul.f32 %v273, %v273
    %v278 = vsub.f32 %v274, %v276
    %v279 = vsub.f32 %v275, %v277
    %v280 = vmax.f32 %v278, 0.0
    %v281 = vmax.f32 %v279, 0.0
    %v282 = vadd.f32 %v280, 1e-05
    %v283 = vadd.f32 %v281, 1e-05
    %v284 = vrsqrt.pop %v282
    %v285 = vrsqrt.pop %v283
    %v286 = vld [vmem:[%s2] sm:$0xff]
    %v287 = vld [vmem:[%s2 + $0x8] sm:$0xff]
    %v288 = vmul.f32 %v284, %v286
    %v289 = vmul.f32 %v285, %v287
    %v290 = vld [vmem:[%s3] sm:$0xff]
    %v291 = vld [vmem:[%s3 + $0x8] sm:$0xff]
    %v292 = vmul.f32 %v272, %v288
    %v293 = vmul.f32 %v273, %v289
    %v294 = vsub.f32 %v290, %v292
    %v295 = vsub.f32 %v291, %v293
    %297 = vset.pattern.permute.xlu0 0
    %298 = vperm.xlu0 %297, %v288
    %v299 = vpop.permute.xlu0 %298
    %302 = vset.pattern.permute.xlu0 0
    %303 = vperm.xlu0 %302, %v289
    %v304 = vpop.permute.xlu0 %303
    %v306 = vmul.f32 %v205, %v299
    %v307 = vmul.f32 %v206, %v299
    %v308 = vmul.f32 %v207, %v304
    %v309 = vmul.f32 %v208, %v304
    %311 = vset.pattern.permute.xlu0 0
    %312 = vperm.xlu0 %311, %v294
    %v313 = vpop.permute.xlu0 %312
    %316 = vset.pattern.permute.xlu0 0
    %317 = vperm.xlu0 %316, %v295
    %v318 = vpop.permute.xlu0 %317
    %v320 = vadd.f32 %v306, %v313
    %v321 = vadd.f32 %v307, %v313
    %v322 = vadd.f32 %v308, %v318
    %v323 = vadd.f32 %v309, %v318
    %v324 = vmax.f32 %v320, 0.0
    %v325 = vmax.f32 %v321, 0.0
    %v326 = vmax.f32 %v322, 0.0
    %v327 = vmax.f32 %v323, 0.0
    %v328 = vmul.f32 %v232, %v299
    %v329 = vmul.f32 %v233, %v299
    %v330 = vmul.f32 %v234, %v304
    %v331 = vmul.f32 %v235, %v304
    %v332 = vadd.f32 %v328, %v313
    %v333 = vadd.f32 %v329, %v313
    %v334 = vadd.f32 %v330, %v318
    %v335 = vadd.f32 %v331, %v318
    %v336 = vmax.f32 %v332, 0.0
    %v337 = vmax.f32 %v333, 0.0
    %v338 = vmax.f32 %v334, 0.0
    %v339 = vmax.f32 %v335, 0.0
    %340 = vadd.xlane.f32.xlu0 %v324
    %v341 = vpop.xlane.xlu0 %340
    %342 = vadd.xlane.f32.xlu0 %v326
    %v343 = vpop.xlane.xlu0 %342
    %344 = vadd.xlane.f32.xlu0 %v336
    %v345 = vpop.xlane.xlu0 %344
    %346 = vadd.xlane.f32.xlu0 %v338
    %v347 = vpop.xlane.xlu0 %346
    %v348 = vadd.f32 %v341, %v345
    %v349 = vadd.f32 %v343, %v347
    %v350 = vmul.f32 %v348, 0.00390625
    %v351 = vmul.f32 %v349, 0.00390625
    %352 = vmax.xlane.f32.xlu0 %v324
    %v353 = vpop.xlane.xlu0 %352
    %354 = vmax.xlane.f32.xlu0 %v326
    %v355 = vpop.xlane.xlu0 %354
    %356 = vmax.xlane.f32.xlu0 %v336
    %v357 = vpop.xlane.xlu0 %356
    %358 = vmax.xlane.f32.xlu0 %v338
    %v359 = vpop.xlane.xlu0 %358
    %v360 = vmax.f32 %v353, %v357
    %v361 = vmax.f32 %v355, %v359
    %362 = vadd.xlane.f32.xlu0 %v325
    %v363 = vpop.xlane.xlu0 %362
    %364 = vadd.xlane.f32.xlu0 %v327
    %v365 = vpop.xlane.xlu0 %364
    %366 = vadd.xlane.f32.xlu0 %v337
    %v367 = vpop.xlane.xlu0 %366
    %368 = vadd.xlane.f32.xlu0 %v339
    %v369 = vpop.xlane.xlu0 %368
    %v370 = vadd.f32 %v363, %v367
    %v371 = vadd.f32 %v365, %v369
    %v372 = vmul.f32 %v370, 0.00390625
    %v373 = vmul.f32 %v371, 0.00390625
    %374 = vmax.xlane.f32.xlu0 %v325
    %v375 = vpop.xlane.xlu0 %374
    %376 = vmax.xlane.f32.xlu0 %v327
    %v377 = vpop.xlane.xlu0 %376
    %378 = vmax.xlane.f32.xlu0 %v337
    %v379 = vpop.xlane.xlu0 %378
    %380 = vmax.xlane.f32.xlu0 %v339
    %v381 = vpop.xlane.xlu0 %380
    %v382 = vmax.f32 %v375, %v379
    %v383 = vmax.f32 %v377, %v381
    %vm384 = vcmask 7168
    %v385 = vsel %vm384, %v350, %v372
    %v386 = vsel %vm384, %v351, %v373
    %v387 = vsel %vm384, %v360, %v382
    %v388 = vsel %vm384, %v361, %v383
    %391 = vrot.lane.b32.xlu0 %v387, 2
    %v392 = vpop.permute.xlu0 %391
    %393 = vrot.lane.b32.xlu0 %v388, 2
    %v394 = vpop.permute.xlu0 %393
    %vm397 = vcmask 15360
    %v398 = vsel %vm397, %v385, %v392
    %v399 = vsel %vm397, %v386, %v394
    %v400 = vld [vmem:[%s4] sm:$0xf]
    %vm401 = vcmask 130048
    %v403 = vsel %vm401, %v400, 0
    %405 = vmatprep.subr.mxu0 0.0
    %406 = vmatpush1.msra.mxu0 %v398
    %407 = vmatprep.subr.mxu0 0.0
    %408 = vmatpush1.msra.mxu0 %v399
    %409 = vmatprep.subr.mxu0 0.0
    %410 = vmatpush1.msra.mxu0 0.0
    %411 = vmatprep.subr.mxu0 0.0
    %412 = vmatpush1.msra.mxu0 0.0
    %413 = vmatprep.subr.mxu0 0.0
    %414 = vmatpush1.msra.mxu0 0.0
    %415 = vmatprep.subr.mxu0 0.0
    %416 = vmatpush1.msra.mxu0 0.0
    %417 = vmatprep.subr.mxu0 0.0
    %418 = vmatpush1.msra.mxu0 0.0
    %419 = vmatprep.subr.mxu0 0.0
    %420 = vmatpush1.msra.mxu0 0.0
    %421 = vmatprep.subr.mxu0 0.0
    %422 = vmatpush1.msra.mxu0 0.0
    %423 = vmatprep.subr.mxu0 0.0
    %424 = vmatpush1.msra.mxu0 0.0
    %425 = vmatprep.subr.mxu0 0.0
    %426 = vmatpush1.msra.mxu0 0.0
    %427 = vmatprep.subr.mxu0 0.0
    %428 = vmatpush1.msra.mxu0 0.0
    %429 = vmatprep.subr.mxu0 0.0
    %430 = vmatpush1.msra.mxu0 0.0
    %431 = vmatprep.subr.mxu0 0.0
    %432 = vmatpush1.msra.mxu0 0.0
    %433 = vmatprep.subr.mxu0 0.0
    %434 = vmatpush1.msra.mxu0 0.0
    %435 = vmatprep.subr.mxu0 0.0
    %436 = vmatpush1.msra.mxu0 0.0
    %437 = vmatprep.subr.mxu0 0.0
    %438 = vmatpush1.msra.mxu0 0.0
    %439 = vmatprep.subr.mxu0 0.0
    %440 = vmatpush1.msra.mxu0 0.0
    %441 = vmatprep.subr.mxu0 0.0
    %442 = vmatpush1.msra.mxu0 0.0
    %443 = vmatprep.subr.mxu0 0.0
    %444 = vmatpush1.msra.mxu0 0.0
    %445 = vmatprep.subr.mxu0 0.0
    %446 = vmatpush1.msra.mxu0 0.0
    %447 = vmatprep.subr.mxu0 0.0
    %448 = vmatpush1.msra.mxu0 0.0
    %449 = vmatprep.subr.mxu0 0.0
    %450 = vmatpush1.msra.mxu0 0.0
    %451 = vmatprep.subr.mxu0 0.0
    %452 = vmatpush1.msra.mxu0 0.0
    %453 = vmatprep.subr.mxu0 0.0
    %454 = vmatpush1.msra.mxu0 0.0
    %455 = vmatprep.subr.mxu0 0.0
    %456 = vmatpush1.msra.mxu0 0.0
    %457 = vmatprep.subr.mxu0 0.0
    %458 = vmatpush1.msra.mxu0 0.0
    %459 = vmatprep.subr.mxu0 0.0
    %460 = vmatpush1.msra.mxu0 0.0
    %461 = vmatprep.subr.mxu0 0.0
    %462 = vmatpush1.msra.mxu0 0.0
    %463 = vmatprep.subr.mxu0 0.0
    %464 = vmatpush1.msra.mxu0 0.0
    %465 = vmatprep.subr.mxu0 0.0
    %466 = vmatpush1.msra.mxu0 0.0
    %467 = vmatprep.subr.mxu0 0.0
    %468 = vmatpush1.msra.mxu0 0.0
    %469 = vmatprep.mubr.f32.mxu0 0.0
    %470 = vmatmul.mubr.f32.gmra.mrb[0].mxu0 %v403
    %v471 = vpop.f32.mrb[0].mxu0
    %v472 = vadd.f32 0.0, %v471
    %v473 = vpop.f32.mrb[0].mxu0
    %474 = vdwg.mxu0
    %v475 = vmax.f32 %v472, 0.0
    %v476 = vld [vmem:[%s5] sm:$0xff]
    %v477 = vld [vmem:[%s5 + $0x8] sm:$0xff]
    %vm478 = vcmask 31744
    %v480 = vsel %vm478, %v476, 0
    %v483 = vsel %vm478, %v477, 0
    %vm485 = vcmask 1043456
    %v487 = vsel %vm485, %v475, 0
    %489 = vmatprep.subr.mxu0 0.0
    %490 = vmatpush1.msra.mxu0 %v487
    %491 = vmatprep.subr.mxu0 0.0
    %492 = vmatpush1.msra.mxu0 0.0
    %493 = vmatprep.subr.mxu0 0.0
    %494 = vmatpush1.msra.mxu0 0.0
    %495 = vmatprep.subr.mxu0 0.0
    %496 = vmatpush1.msra.mxu0 0.0
    %497 = vmatprep.subr.mxu0 0.0
    %498 = vmatpush1.msra.mxu0 0.0
    %499 = vmatprep.subr.mxu0 0.0
    %500 = vmatpush1.msra.mxu0 0.0
    %501 = vmatprep.subr.mxu0 0.0
    %502 = vmatpush1.msra.mxu0 0.0
    %503 = vmatprep.subr.mxu0 0.0
    %504 = vmatpush1.msra.mxu0 0.0
    %505 = vmatprep.subr.mxu0 0.0
    %506 = vmatpush1.msra.mxu0 0.0
    %507 = vmatprep.subr.mxu0 0.0
    %508 = vmatpush1.msra.mxu0 0.0
    %509 = vmatprep.subr.mxu0 0.0
    %510 = vmatpush1.msra.mxu0 0.0
    %511 = vmatprep.subr.mxu0 0.0
    %512 = vmatpush1.msra.mxu0 0.0
    %513 = vmatprep.subr.mxu0 0.0
    %514 = vmatpush1.msra.mxu0 0.0
    %515 = vmatprep.subr.mxu0 0.0
    %516 = vmatpush1.msra.mxu0 0.0
    %517 = vmatprep.subr.mxu0 0.0
    %518 = vmatpush1.msra.mxu0 0.0
    %519 = vmatprep.subr.mxu0 0.0
    %520 = vmatpush1.msra.mxu0 0.0
    %521 = vmatprep.subr.mxu0 0.0
    %522 = vmatpush1.msra.mxu0 0.0
    %523 = vmatprep.subr.mxu0 0.0
    %524 = vmatpush1.msra.mxu0 0.0
    %525 = vmatprep.subr.mxu0 0.0
    %526 = vmatpush1.msra.mxu0 0.0
    %527 = vmatprep.subr.mxu0 0.0
    %528 = vmatpush1.msra.mxu0 0.0
    %529 = vmatprep.subr.mxu0 0.0
    %530 = vmatpush1.msra.mxu0 0.0
    %531 = vmatprep.subr.mxu0 0.0
    %532 = vmatpush1.msra.mxu0 0.0
    %533 = vmatprep.subr.mxu0 0.0
    %534 = vmatpush1.msra.mxu0 0.0
    %535 = vmatprep.subr.mxu0 0.0
    %536 = vmatpush1.msra.mxu0 0.0
    %537 = vmatprep.subr.mxu0 0.0
    %538 = vmatpush1.msra.mxu0 0.0
    %539 = vmatprep.subr.mxu0 0.0
    %540 = vmatpush1.msra.mxu0 0.0
    %541 = vmatprep.subr.mxu0 0.0
    %542 = vmatpush1.msra.mxu0 0.0
    %543 = vmatprep.subr.mxu0 0.0
    %544 = vmatpush1.msra.mxu0 0.0
    %545 = vmatprep.subr.mxu0 0.0
    %546 = vmatpush1.msra.mxu0 0.0
    %547 = vmatprep.subr.mxu0 0.0
    %548 = vmatpush1.msra.mxu0 0.0
    %549 = vmatprep.subr.mxu0 0.0
    %550 = vmatpush1.msra.mxu0 0.0
    %551 = vmatprep.subr.mxu0 0.0
    %552 = vmatpush1.msra.mxu0 0.0
    %553 = vmatprep.mubr.f32.mxu0 0.0
    %554 = vmatmul.mubr.f32.gmra.mrb[0].mxu0 %v480
    %v555 = vpop.f32.mrb[0].mxu0
    %v556 = vadd.f32 0.0, %v555
    %v557 = vpop.f32.mrb[0].mxu0
    %558 = vmatprep.mubr.f32.mxu0 0.0
    %559 = vmatmul.mubr.f32.gmra.mrb[0].mxu0 %v483
    %v560 = vpop.f32.mrb[0].mxu0
    %v561 = vadd.f32 0.0, %v560
    %v562 = vpop.f32.mrb[0].mxu0
    %563 = vdwg.mxu0
    %566 = vrot.lane.b32.xlu0 %v556, 126
    %v567 = vpop.permute.xlu0 %566
    %568 = vrot.lane.b32.xlu0 %v561, 126
    %v569 = vpop.permute.xlu0 %568
    %v572 = vadd.f32 %v556, %v567
    %v573 = vadd.f32 %v561, %v569
    %v574 = vsub.f32 0.0, %v572
    %v575 = vsub.f32 0.0, %v573
    %v576 = vmul.f32 %v574, 1.442695
    %v577 = vpow.pop %v576
    %v578 = vmul.f32 %v575, 1.442695
    %v579 = vpow.pop %v578
    %v580 = vadd.f32 %v577, 1.0
    %v581 = vadd.f32 %v579, 1.0
    %v582 = vrcp.pop %v580
    %v583 = vrcp.pop %v581
    %585 = vset.pattern.permute.xlu0 0
    %586 = vperm.xlu0 %585, %v582
    %v587 = vpop.permute.xlu0 %586
    %590 = vset.pattern.permute.xlu0 0
    %591 = vperm.xlu0 %590, %v583
    %v592 = vpop.permute.xlu0 %591
    %594 = vset.pattern.permute.xlu0 1
    %595 = vperm.xlu0 %594, %v582
    %v596 = vpop.permute.xlu0 %595
    %598 = vset.pattern.permute.xlu0 1
    %599 = vperm.xlu0 %598, %v583
    %v600 = vpop.permute.xlu0 %599
    %v602 = vmul.f32 %v324, %v587
    %v603 = vmul.f32 %v325, %v596
    %v604 = vmul.f32 %v326, %v592
    %v605 = vmul.f32 %v327, %v600
    %v606 = vmul.f32 %v336, %v587
    %v607 = vmul.f32 %v337, %v596
    %v608 = vmul.f32 %v338, %v592
    %v609 = vmul.f32 %v339, %v600
    %v610 = vadd.f32 %v602, %v604
    %v611 = vrot.slane %v610, 4
    %v612 = vadd.f32 %v610, %v611
    %v613 = vrot.slane %v612, 2
    %v614 = vadd.f32 %v612, %v613
    %v615 = vrot.slane %v614, 1
    %v616 = vadd.f32 %v614, %v615
    %v617 = vadd.f32 %v603, %v605
    %v618 = vrot.slane %v617, 4
    %v619 = vadd.f32 %v617, %v618
    %v620 = vrot.slane %v619, 2
    %v621 = vadd.f32 %v619, %v620
    %v622 = vrot.slane %v621, 1
    %v623 = vadd.f32 %v621, %v622
    %v624 = vrcp.pop 16.0
    %v625 = vmul.f32 %v616, %v624
    %v626 = vmul.f32 %v623, %v624
    %v627 = vmax.f32 %v602, %v604
    %v628 = vrot.slane %v627, 4
    %v629 = vmax.f32 %v627, %v628
    %v630 = vrot.slane %v629, 2
    %v631 = vmax.f32 %v629, %v630
    %v632 = vrot.slane %v631, 1
    %v633 = vmax.f32 %v631, %v632
    %v634 = vmax.f32 %v603, %v605
    %v635 = vrot.slane %v634, 4
    %v636 = vmax.f32 %v634, %v635
    %v637 = vrot.slane %v636, 2
    %v638 = vmax.f32 %v636, %v637
    %v639 = vrot.slane %v638, 1
    %v640 = vmax.f32 %v638, %v639
    %vm641 = vcmask 1040384
    %v642 = vsel %vm641, %v625, %v633
    %v643 = vsel %vm641, %v626, %v640
    %v644 = vadd.f32 %v606, %v608
    %v645 = vrot.slane %v644, 4
    %v646 = vadd.f32 %v644, %v645
    %v647 = vrot.slane %v646, 2
    %v648 = vadd.f32 %v646, %v647
    %v649 = vrot.slane %v648, 1
    %v650 = vadd.f32 %v648, %v649
    %v651 = vadd.f32 %v607, %v609
    %v652 = vrot.slane %v651, 4
    %v653 = vadd.f32 %v651, %v652
    %v654 = vrot.slane %v653, 2
    %v655 = vadd.f32 %v653, %v654
    %v656 = vrot.slane %v655, 1
    %v657 = vadd.f32 %v655, %v656
    %v658 = vmul.f32 %v650, %v624
    %v659 = vmul.f32 %v657, %v624
    %v660 = vmax.f32 %v606, %v608
    %v661 = vrot.slane %v660, 4
    %v662 = vmax.f32 %v660, %v661
    %v663 = vrot.slane %v662, 2
    %v664 = vmax.f32 %v662, %v663
    %v665 = vrot.slane %v664, 1
    %v666 = vmax.f32 %v664, %v665
    %v667 = vmax.f32 %v607, %v609
    %v668 = vrot.slane %v667, 4
    %v669 = vmax.f32 %v667, %v668
    %v670 = vrot.slane %v669, 2
    %v671 = vmax.f32 %v669, %v670
    %v672 = vrot.slane %v671, 1
    %v673 = vmax.f32 %v671, %v672
    %v674 = vsel %vm641, %v658, %v666
    %v675 = vsel %vm641, %v659, %v673
    %v676 = vld [vmem:[%s6] sm:$0x3]
    %677 = vrot.lane.b32.xlu0 %v642, 1
    %v678 = vpop.permute.xlu0 %677
    %679 = vrot.lane.b32.xlu0 %v643, 1
    %v680 = vpop.permute.xlu0 %679
    %v681 = vsel %vm189, %v678, %v680
    %v682 = vsel %vm189, %v680, %v678
    %v683 = vsel %vm200, %v682, 0.0
    %v684 = vsel %vm200, %v681, 0.0
    %685 = vrot.lane.b32.xlu0 %v642, 127
    %v686 = vpop.permute.xlu0 %685
    %687 = vrot.lane.b32.xlu0 %v643, 127
    %v688 = vpop.permute.xlu0 %687
    %v689 = vsel %vm217, %v686, %v688
    %v690 = vsel %vm217, %v688, %v686
    %v691 = vsel %vm227, %v689, 0.0
    %v692 = vsel %vm227, %v690, 0.0
    %693 = vrot.lane.b32.xlu0 %v642, 126
    %v694 = vpop.permute.xlu0 %693
    %695 = vrot.lane.b32.xlu0 %v643, 126
    %v696 = vpop.permute.xlu0 %695
    %vm697 = vcmp.lt.s32.totalorder %v31, 126
    %v698 = vsel %vm697, %v694, %v696
    %v699 = vsel %vm697, %v696, %v694
    %v700 = vsel %vm697, 1, 0
    %v701 = vlaneseq
    %v702 = vshrl.u32 %v701, 7
    %v703 = vsub.s32 0, %v702
    %v704 = vrot.slane %v700, %v703
    %vm705 = vcmp.eq.s32.totalorder %v704, 1
    %v706 = vsel %vm705, %v698, 0.0
    %v707 = vsel %vm705, %v699, 0.0
    %708 = vrot.lane.b32.xlu0 %v674, 2
    %v709 = vpop.permute.xlu0 %708
    %710 = vrot.lane.b32.xlu0 %v675, 2
    %v711 = vpop.permute.xlu0 %710
    %vm712 = vcmp.lt.s32.totalorder %v31, 2
    %v713 = vsel %vm712, %v709, %v711
    %v714 = vsel %vm712, %v711, %v709
    %vm715 = vcmp.ge.s32.totalorder %v31, 2
    %v716 = vsel %vm715, 1, 0
    %v717 = vlaneseq
    %v718 = vshrl.u32 %v717, 7
    %v719 = vsub.s32 0, %v718
    %v720 = vrot.slane %v716, %v719
    %vm721 = vcmp.eq.s32.totalorder %v720, 1
    %v722 = vsel %vm721, %v714, 0.0
    %v723 = vsel %vm721, %v713, 0.0
    %724 = vrot.lane.b32.xlu0 %v674, 1
    %v725 = vpop.permute.xlu0 %724
    %726 = vrot.lane.b32.xlu0 %v675, 1
    %v727 = vpop.permute.xlu0 %726
    %v728 = vsel %vm189, %v725, %v727
    %v729 = vsel %vm189, %v727, %v725
    %v730 = vsel %vm200, %v729, 0.0
    %v731 = vsel %vm200, %v728, 0.0
    %732 = vrot.lane.b32.xlu0 %v674, 127
    %v733 = vpop.permute.xlu0 %732
    %734 = vrot.lane.b32.xlu0 %v675, 127
    %v735 = vpop.permute.xlu0 %734
    %v736 = vsel %vm217, %v733, %v735
    %v737 = vsel %vm217, %v735, %v733
    %v738 = vsel %vm227, %v736, 0.0
    %v739 = vsel %vm227, %v737, 0.0
    %741 = vset.pattern.permute.xlu0 0
    %742 = vperm.xlu0 %741, %v676
    %v743 = vpop.permute.xlu0 %742
    %v745 = vmul.f32 %v743, %v722
    %v746 = vmul.f32 %v743, %v723
    %747 = vset.pattern.permute.xlu0 1
    %748 = vperm.xlu0 %747, %v676
    %v749 = vpop.permute.xlu0 %748
    %v751 = vmul.f32 %v749, %v683
    %v752 = vmul.f32 %v749, %v684
    %v753 = vadd.f32 %v745, %v751
    %v754 = vadd.f32 %v746, %v752
    %755 = vset.pattern.permute.xlu0 2
    %756 = vperm.xlu0 %755, %v676
    %v757 = vpop.permute.xlu0 %756
    %v759 = vmul.f32 %v757, %v730
    %v760 = vmul.f32 %v757, %v731
    %v761 = vadd.f32 %v753, %v759
    %v762 = vadd.f32 %v754, %v760
    %763 = vset.pattern.permute.xlu0 3
    %764 = vperm.xlu0 %763, %v676
    %v765 = vpop.permute.xlu0 %764
    %v767 = vmul.f32 %v765, %v642
    %v768 = vmul.f32 %v765, %v643
    %v769 = vadd.f32 %v761, %v767
    %v770 = vadd.f32 %v762, %v768
    %771 = vset.pattern.permute.xlu0 4
    %772 = vperm.xlu0 %771, %v676
    %v773 = vpop.permute.xlu0 %772
    %v775 = vmul.f32 %v773, %v674
    %v776 = vmul.f32 %v773, %v675
    %v777 = vadd.f32 %v769, %v775
    %v778 = vadd.f32 %v770, %v776
    %779 = vset.pattern.permute.xlu0 5
    %780 = vperm.xlu0 %779, %v676
    %v781 = vpop.permute.xlu0 %780
    %v783 = vmul.f32 %v781, %v691
    %v784 = vmul.f32 %v781, %v692
    %v785 = vadd.f32 %v777, %v783
    %v786 = vadd.f32 %v778, %v784
    %787 = vset.pattern.permute.xlu0 6
    %788 = vperm.xlu0 %787, %v676
    %v789 = vpop.permute.xlu0 %788
    %v791 = vmul.f32 %v789, %v738
    %v792 = vmul.f32 %v789, %v739
    %v793 = vadd.f32 %v785, %v791
    %v794 = vadd.f32 %v786, %v792
    %vm795 = vcmask 1041408
    %v796 = vsel %vm795, %v793, 0.0
    %v797 = vrot.slane %v796, 4
    %v798 = vadd.f32 %v796, %v797
    %v799 = vrot.slane %v798, 2
    %v800 = vadd.f32 %v798, %v799
    %v801 = vrot.slane %v800, 1
    %v802 = vadd.f32 %v800, %v801
    %v803 = vsel %vm795, %v794, 0.0
    %v804 = vrot.slane %v803, 4
    %v805 = vadd.f32 %v803, %v804
    %v806 = vrot.slane %v805, 2
    %v807 = vadd.f32 %v805, %v806
    %v808 = vrot.slane %v807, 1
    %v809 = vadd.f32 %v807, %v808
    %v810 = vmul.f32 %v743, %v683
    %v811 = vmul.f32 %v743, %v684
    %v812 = vmul.f32 %v749, %v730
    %v813 = vmul.f32 %v749, %v731
    %v814 = vadd.f32 %v810, %v812
    %v815 = vadd.f32 %v811, %v813
    %v816 = vmul.f32 %v757, %v642
    %v817 = vmul.f32 %v757, %v643
    %v818 = vadd.f32 %v814, %v816
    %v819 = vadd.f32 %v815, %v817
    %v820 = vmul.f32 %v765, %v674
    %v821 = vmul.f32 %v765, %v675
    %v822 = vadd.f32 %v818, %v820
    %v823 = vadd.f32 %v819, %v821
    %v824 = vmul.f32 %v773, %v691
    %v825 = vmul.f32 %v773, %v692
    %v826 = vadd.f32 %v822, %v824
    %v827 = vadd.f32 %v823, %v825
    %v828 = vmul.f32 %v781, %v738
    %v829 = vmul.f32 %v781, %v739
    %v830 = vadd.f32 %v826, %v828
    %v831 = vadd.f32 %v827, %v829
    %v832 = vmul.f32 %v789, %v706
    %v833 = vmul.f32 %v789, %v707
    %v834 = vadd.f32 %v830, %v832
    %v835 = vadd.f32 %v831, %v833
    %v836 = vsel %vm795, %v834, 0.0
    %v837 = vrot.slane %v836, 4
    %v838 = vadd.f32 %v836, %v837
    %v839 = vrot.slane %v838, 2
    %v840 = vadd.f32 %v838, %v839
    %v841 = vrot.slane %v840, 1
    %v842 = vadd.f32 %v840, %v841
    %v843 = vsel %vm795, %v835, 0.0
    %v844 = vrot.slane %v843, 4
    %v845 = vadd.f32 %v843, %v844
    %v846 = vrot.slane %v845, 2
    %v847 = vadd.f32 %v845, %v846
    %v848 = vrot.slane %v847, 1
    %v849 = vadd.f32 %v847, %v848
    %v850 = vsub.f32 0.0, %v802
    %v851 = vsub.f32 0.0, %v809
    %v852 = vmul.f32 %v850, 1.442695
    %v853 = vpow.pop %v852
    %v854 = vmul.f32 %v851, 1.442695
    %v855 = vpow.pop %v854
    %v856 = vadd.f32 %v853, 1.0
    %v857 = vadd.f32 %v855, 1.0
    %v858 = vrcp.pop %v856
    %v859 = vrcp.pop %v857
    %v860 = vmul.f32 %v602, %v858
    %v861 = vmul.f32 %v603, %v859
    %v862 = vmul.f32 %v604, %v858
    %v863 = vmul.f32 %v605, %v859
    %v864 = vsub.f32 0.0, %v842
    %v865 = vsub.f32 0.0, %v849
    %v866 = vmul.f32 %v864, 1.442695
    %v867 = vpow.pop %v866
    %v868 = vmul.f32 %v865, 1.442695
    %v869 = vpow.pop %v868
    %v870 = vadd.f32 %v867, 1.0
    %v871 = vadd.f32 %v869, 1.0
    %v872 = vrcp.pop %v870
    %v873 = vrcp.pop %v871
    %v874 = vmul.f32 %v606, %v872
    %v875 = vmul.f32 %v607, %v873
    %v876 = vmul.f32 %v608, %v872
    %v877 = vmul.f32 %v609, %v873
    %878 = vst [vmem:[#allocation2] sm:$0xff] %v860
    %879 = vst [vmem:[#allocation2 + $0x8] sm:$0xff] %v862
    %880 = vst [vmem:[#allocation4] sm:$0xff] %v874
    %881 = vst [vmem:[#allocation4 + $0x8] sm:$0xff] %v876
    %s882 = scalar_lea.vmem [#allocation2], 16
    %883 = vst [vmem:[%s882] sm:$0xff] %v861
    %884 = vst [vmem:[%s882 + $0x8] sm:$0xff] %v863
    %s885 = scalar_lea.vmem [#allocation4], 16
    %886 = vst [vmem:[%s885] sm:$0xff] %v875
    %887 = vst [vmem:[%s885 + $0x8] sm:$0xff] %v877
    // Predicated region
    $region30: #{tpu_custom_call.1} parent=1 // pred_check
      _
    $region31: #{tpu_custom_call.1} parent=1 // pred_check_branch
      %889 = sbr.rel (0) target = $region33
    $region32: #{tpu_custom_call.1} parent=1 // pred_region
      %s891 = ssub.s32 512, 512
      %892 = vsyncadd [#allocation3], %s891
      %s893 = sshll.u32 [#allocation2], 4
      %s894 = int_to_ptr.vmem [resolvable:$true] %s893
      %899 = dma.vmem_to_hbm [thread:$0]  %s894, 512, %s7, [#allocation3], 128, 128, 8
    $region33: #{tpu_custom_call.1} parent=1 // pred_fallthru
      _
    // Predicated region
    $region34: #{tpu_custom_call.1} parent=1 // pred_check
      _
    $region35: #{tpu_custom_call.1} parent=1 // pred_check_branch
      %901 = sbr.rel (0) target = $region37
    $region36: #{tpu_custom_call.1} parent=1 // pred_region
      %s903 = ssub.s32 512, 512
      %904 = vsyncadd [#allocation5], %s903
      %s905 = sshll.u32 [#allocation4], 4
      %s906 = int_to_ptr.vmem [resolvable:$true] %s905
      %911 = dma.vmem_to_hbm [thread:$0]  %s906, 512, %s8, [#allocation5], 128, 128, 8
    $region37: #{tpu_custom_call.1} parent=1 // pred_fallthru
      _
    // Predicated region
    $region38: #{tpu_custom_call.1} parent=1 // pred_check
      _
    $region39: #{tpu_custom_call.1} parent=1 // pred_check_branch
      %913 = sbr.rel (0) target = $region41
    $region40: #{tpu_custom_call.1} parent=1 // pred_region
      %914 = dma.done [#allocation3], 512
    $region41: #{tpu_custom_call.1} parent=1 // pred_fallthru
      _
    // Predicated region
    $region42: #{tpu_custom_call.1} parent=1 // pred_check
      _
    $region43: #{tpu_custom_call.1} parent=1 // pred_check_branch
      %916 = sbr.rel (0) target = $region45
    $region44: #{tpu_custom_call.1} parent=1 // pred_region
      %917 = dma.done [#allocation5], 512
    $region45: #{tpu_custom_call.1} parent=1 // pred_fallthru
      _
    %918 = vsyncpa [#allocation3], 1
    %919 = vsyncpa [#allocation5], 1

</llo_original>
